<compile_context>
chip_gen: v7x
topology: tpu7x:2x2x1
jax: 0.10.0
libtpu: 0.0.40
codegen_flags: <defaults>
</compile_context>

<pallas_src>
import functools

import jax
import jax.numpy as jnp
from jax.experimental import pallas as pl
from jax.experimental.pallas import tpu as pltpu


# ----------------------------------------------------------------------------
# Pallas kernel: Bt graphs per grid step, node axis folded into the MXU M dim
# ----------------------------------------------------------------------------
def edge_gnn_kernel(
    x_ref,       # (Bt*N, F)      node features (flattened over the step)
    adj_ref,     # (Bt*N, Bt*N)   block-diagonal adjacency for the step
    we1_ref,     # (F, E)         edge-scorer layer 1  (mxu_dtype)
    we2_ref,     # (E, E)         edge-scorer layer 2  (mxu_dtype)
    wc_ref,      # (F, H)         self.conv            (mxu_dtype)
    w1_ref,      # (H, H2)        classifier[0], spectral-normalized
    w2_ref,      # (H2, C)        classifier[3], spectral-normalized
    bias_ref,    # (8, D)         packed [be1, be2, bc, b1, ln_g, ln_b, b2, 0]
    logits_ref,  # out: (Bt, C_pad)        lane-dense padded logits
    wadj_ref,    # out: (Bt*N, Bt*N)       block-diag adjs * edge_weights
    reg_ref,     # out: (1, 1, 128)        per-step sum(|wadj|), broadcast
    *,
    bt,
    mxu_dtype=jnp.bfloat16,
):
    BN, F = x_ref.shape
    n = BN // bt
    E = we1_ref.shape[1]
    H = wc_ref.shape[1]
    H2 = w1_ref.shape[1]
    C = w2_ref.shape[1]
    C_pad = logits_ref.shape[1]
    f32 = jnp.float32

    def dot(a, b):
        # weights are already mxu_dtype (cast once in the wrapper) -> astype
        # is a no-op for them; only activations get converted here.
        return jnp.dot(a.astype(mxu_dtype), b.astype(mxu_dtype),
                       preferred_element_type=f32)

    x = x_ref[...].astype(f32)          # (BN, F)
    adj_bd = adj_ref[...].astype(f32)   # (BN, BN) block-diagonal

    # ---- packed biases ----
    be1 = bias_ref[0:1, :E]
    be2 = bias_ref[1:2, :E]
    bc = bias_ref[2:3, :H]
    b1 = bias_ref[3:4, :H2]
    ln_g = bias_ref[4:5, :H2]
    ln_b = bias_ref[5:6, :H2]
    b2 = bias_ref[6:7, :C]

    # ---- F.normalize(node_feat, p=2, dim=2): x / max(||x||, 1e-12) ----
    ss = jnp.sum(x * x, axis=-1, keepdims=True)
    xn = x * jax.lax.rsqrt(jnp.maximum(ss, 1e-24))          # (BN, F)

    # ---- EdgeScoringNetwork.compute_edge_weights ----
    # TODO(synk): exact EdgeScoringNetwork architecture / Gumbel-Sigmoid / L0
    # gating not given; deterministic (eval-mode) 2-layer MLP embedding +
    # scaled dot-product scores + sigmoid, masked by adjacency.
    e = jnp.maximum(dot(xn, we1_ref[...]) + be1, 0.0)        # (BN, E)
    e = jnp.maximum(dot(e, we2_ref[...]) + be2, 0.0)

    # One dense gram over the folded batch (fills the MXU M/N dims); the
    # block-diagonal adjacency zeroes every cross-graph pair.
    e_mx = e.astype(mxu_dtype)                               # hoisted cast
    scores = jax.lax.dot_general(
        e_mx, e_mx,
        dimension_numbers=(((1,), (1,)), ((), ())),
        preferred_element_type=f32) * (1.0 / (E ** 0.5))     # (BN, BN)
    wadj = adj_bd * jax.nn.sigmoid(scores)                   # block-diagonal

    # ---- aggregate(): row-sum folded into the matmul via a ones column ----
    x_aug = jnp.concatenate([xn, jnp.ones((BN, 1), f32)], axis=1)  # (BN, F+1)
    h_aug = dot(wadj, x_aug)                                 # (BN, F+1)
    row_sum = h_aug[:, F:F + 1]                              # (BN, 1)
    h = h_aug[:, :F] * pl.reciprocal(row_sum + 1e-8, approx=True)

    # ---- self.conv Linear + ReLU ----
    h = jnp.maximum(dot(h, wc_ref[...]) + bc, 0.0)           # (BN, H)

    # ---- EdgeWeightedAttentionPooling ----
    # TODO(synk): exact pooling formula not given; softmax over per-node
    # weighted degree, then weighted sum of node representations.
    rs3 = row_sum.reshape(bt, n, 1)
    h3 = h.reshape(bt, n, H)
    strength = rs3 - jnp.max(rs3, axis=1, keepdims=True)
    attn = jnp.exp(strength)
    attn = attn * pl.reciprocal(jnp.sum(attn, axis=1, keepdims=True) + 1e-8,
                                approx=True)
    graph_rep = jnp.sum(attn * h3, axis=1)                   # (Bt, H)

    # ---- classifier: SN-Linear -> ReLU -> LayerNorm -> SN-Linear ----
    z = jnp.maximum(dot(graph_rep, w1_ref[...]) + b1, 0.0)   # (Bt, H2)
    mu = jnp.mean(z, axis=-1, keepdims=True)
    var = jnp.mean((z - mu) ** 2, axis=-1, keepdims=True)
    z = (z - mu) * jax.lax.rsqrt(var + 1e-5)
    z = z * ln_g + ln_b
    logits = dot(z, w2_ref[...]) + b2                        # (Bt, C)

    # ---- lane/sublane-dense stores ----
    if C_pad > C:
        logits = jnp.concatenate(
            [logits, jnp.zeros((bt, C_pad - C), f32)], axis=-1)
    logits_ref[...] = logits
    wadj_ref[...] = wadj
    # edge-sparsity partial sum (wadj >= 0 so |wadj| == wadj)
    reg_ref[...] = jnp.zeros((1, 1, reg_ref.shape[2]), f32) + jnp.sum(wadj)


# ----------------------------------------------------------------------------
# Wrapper
# ----------------------------------------------------------------------------
def improved_edge_gnn_forward(node_feat, labels, adjs, params,
                              lambda_reg=0.01, block_b=16,
                              mxu_dtype=jnp.bfloat16):
    B, N, F = node_feat.shape
    E = params["we1"].shape[1]
    H = params["wc"].shape[1]
    H2 = params["w1"].shape[1]
    C = params["w2"].shape[1]
    LANE = 128

    # ---- batch tile: multiple of 8 (sublane-aligned logits) and sized so
    #      Bt*N fills the MXU M dim; capped so the (Bt*N)^2 gram stays small.
    #      v5e/v6e: pass block_b=B for a single grid step (1 TC/chip);
    #      v7x: pick block_b so the step count is a multiple of 2.
    MAX_BN = 512
    Bt = ((min(block_b, max(B, 1)) + 7) // 8) * 8
    Bt = max(8, min(Bt, max(8, (MAX_BN // N) // 8 * 8)))
    num_steps = -(-B // Bt)
    B_pad = num_steps * Bt
    BN = Bt * N
    # TODO(synk): for very large graphs (Bt*N >> 512) a per-graph batched-score
    # variant with per-graph wadj writeback would be needed.

    if B_pad != B:
        pad = B_pad - B
        node_feat_p = jnp.concatenate(
            [node_feat, jnp.zeros((pad, N, F), node_feat.dtype)], axis=0)
        adjs_p = jnp.concatenate(
            [adjs, jnp.zeros((pad, N, N), adjs.dtype)], axis=0)
    else:
        node_feat_p, adjs_p = node_feat, adjs

    C_pad = max(LANE, ((C + LANE - 1) // LANE) * LANE)

    # ---- layout plumbing (wrapper-side, plain XLA) ----
    # Flattened node features and a block-diagonal adjacency per step; this
    # lets the kernel use one dense gram / aggregation matmul instead of Bt
    # tiny batched passes.  Extra HBM bytes are negligible at Bt*N <= 512.
    x_flat = node_feat_p.astype(jnp.float32).reshape(B_pad * N, F)
    gid = jnp.arange(BN, dtype=jnp.int32) // N
    blk_mask = (gid[:, None] == gid[None, :]).astype(jnp.float32)    # (BN,BN)
    a_rows = adjs_p.astype(jnp.float32).reshape(num_steps, BN, N)
    adj_bd = (jnp.tile(a_rows, (1, 1, Bt)) * blk_mask[None]
              ).reshape(num_steps * BN, BN)

    # ---- weights cast to the MXU dtype once, outside the kernel ----
    we1 = params["we1"].astype(mxu_dtype)
    we2 = params["we2"].astype(mxu_dtype)
    wc = params["wc"].astype(mxu_dtype)
    w1 = params["w1"].astype(mxu_dtype)
    w2 = params["w2"].astype(mxu_dtype)

    # ---- pack the 7 small bias / LayerNorm vectors into one (8, D) array ----
    D = max(E, H, H2, C)

    def row(v):
        v = jnp.asarray(v, jnp.float32).reshape(-1)
        return jnp.pad(v, (0, D - v.shape[0]))

    bias_pack = jnp.stack([
        row(params["be1"]), row(params["be2"]), row(params["bc"]),
        row(params["b1"]), row(params["ln_g"]), row(params["ln_b"]),
        row(params["b2"]), jnp.zeros((D,), jnp.float32),
    ], axis=0)                                   # (8, D)

    full2d = lambda a: pl.BlockSpec(a.shape, lambda b: (0, 0))

    in_specs = [
        pl.BlockSpec((BN, F), lambda b: (b, 0)),
        pl.BlockSpec((BN, BN), lambda b: (b, 0)),
        full2d(we1), full2d(we2), full2d(wc), full2d(w1), full2d(w2),
        full2d(bias_pack),
    ]
    out_specs = [
        pl.BlockSpec((Bt, C_pad), lambda b: (b, 0)),
        pl.BlockSpec((BN, BN), lambda b: (b, 0)),
        pl.BlockSpec((1, 1, LANE), lambda b: (b, 0, 0)),
    ]
    out_shape = (
        jax.ShapeDtypeStruct((B_pad, C_pad), jnp.float32),
        jax.ShapeDtypeStruct((num_steps * BN, BN), jnp.float32),
        jax.ShapeDtypeStruct((num_steps, 1, LANE), jnp.float32),
    )

    flops = 2 * (B_pad * N * F * E + B_pad * N * E * E
                 + num_steps * BN * BN * E
                 + num_steps * BN * BN * (F + 1)
                 + B_pad * N * F * H + B_pad * H * H2 + B_pad * H2 * C)
    transcendentals = num_steps * BN * BN + 3 * B_pad * N
    bytes_accessed = (4 * (B_pad * N * F + 2 * num_steps * BN * BN
                           + B_pad * C_pad + num_steps * LANE + 8 * D)
                      + 2 * (F * E + E * E + F * H + H * H2 + H2 * C))

    kernel = functools.partial(edge_gnn_kernel, bt=Bt, mxu_dtype=mxu_dtype)

    logits_pad, wadj_flat, reg_rows = pl.pallas_call(
        kernel,
        grid_spec=pltpu.PrefetchScalarGridSpec(
            num_scalar_prefetch=0,
            grid=(num_steps,),
            in_specs=in_specs,
            out_specs=out_specs,
        ),
        out_shape=out_shape,
        compiler_params=pltpu.CompilerParams(
            dimension_semantics=("parallel",),
            vmem_limit_bytes=48 * 1024 * 1024),
        cost_estimate=pl.CostEstimate(
            flops=int(flops),
            transcendentals=int(transcendentals),
            bytes_accessed=int(bytes_accessed)),
    )(x_flat, adj_bd, we1, we2, wc, w1, w2, bias_pack)

    logits = logits_pad[:B, :C]

    # ---- extract per-graph weighted adjacency from the block-diag slabs ----
    w4 = wadj_flat.reshape(num_steps, Bt, N, Bt, N)
    wadj_pg = jnp.diagonal(w4, axis1=1, axis2=3)        # (S, N, N, Bt)
    weighted_adj = jnp.moveaxis(wadj_pg, -1, 1).reshape(B_pad, N, N)[:B]

    # ---- losses (scalar glue, plain JAX) ----
    logp = jax.nn.log_softmax(logits, axis=-1)
    cls_loss = -jnp.mean(jnp.take_along_axis(logp, labels[:, None], axis=-1))
    # TODO(synk): EGLassoRegularization internals not given; L1 edge-sparsity
    # from the in-kernel partial sums (padded graphs contribute exactly 0).
    reg_loss = lambda_reg * jnp.sum(reg_rows[:, 0, 0]) / (B * N * N)
    total_loss = cls_loss + reg_loss

    return logits, labels, total_loss, weighted_adj


# ----------------------------------------------------------------------------
# Deterministic parameter init (synthetic; shapes from __init__)
# ----------------------------------------------------------------------------
def init_params(key, feature_dim, hidden_dim, num_classes, edge_dim):
    ks = jax.random.split(key, 8)

    def kaiming(k, fan_in, shape):
        return jax.random.normal(k, shape, jnp.float32) * jnp.sqrt(2.0 / fan_in)

    def spectral_normalize(w):
        # torch spectral_norm divides W by its largest singular value.
        sigma = jnp.linalg.svd(w, compute_uv=False)[0]
        return w / sigma

    h2 = hidden_dim // 2
    return {
        "we1": kaiming(ks[0], feature_dim, (feature_dim, edge_dim)),
        "be1": jnp.zeros((1, edge_dim), jnp.float32),
        "we2": kaiming(ks[1], edge_dim, (edge_dim, edge_dim)),
        "be2": jnp.zeros((1, edge_dim), jnp.float32),
        "wc": kaiming(ks[2], feature_dim, (feature_dim, hidden_dim)),
        "bc": jnp.zeros((1, hidden_dim), jnp.float32),
        "w1": spectral_normalize(kaiming(ks[3], hidden_dim, (hidden_dim, h2))),
        "b1": jnp.zeros((1, h2), jnp.float32),
        "ln_g": jnp.ones((1, h2), jnp.float32),
        "ln_b": jnp.zeros((1, h2), jnp.float32),
        "w2": spectral_normalize(kaiming(ks[4], h2, (h2, num_classes))),
        "b2": jnp.zeros((1, num_classes), jnp.float32),
    }


if __name__ == "__main__":
    B, N = 32, 8                        # 32 graphs of 8 nodes each
    feature_dim, hidden_dim = 16, 32
    num_classes, edge_dim = 4, 32

    key = jax.random.PRNGKey(0)
    k_x, k_adj, k_lab, k_par = jax.random.split(key, 4)

    node_feat = jax.random.normal(k_x, (B, N, feature_dim), jnp.float32)
    adj_rand = (jax.random.uniform(k_adj, (B, N, N)) < 0.4).astype(jnp.float32)
    adjs = jnp.clip(adj_rand + jnp.swapaxes(adj_rand, 1, 2), 0.0, 1.0)
    adjs = jnp.maximum(adjs, jnp.eye(N, dtype=jnp.float32)[None])  # self-loops
    labels = jax.random.randint(k_lab, (B,), 0, num_classes)

    params = init_params(k_par, feature_dim, hidden_dim, num_classes, edge_dim)

    # block_b=16 -> Bt*N = 128 (full MXU M dim) and 2 grid steps (even count
    # keeps both v7x TensorCores busy; use block_b=B on v5e/v6e for 1 step).
    # mxu_dtype=jnp.float32 gives an exact-parity path if needed.
    fwd = jax.jit(functools.partial(improved_edge_gnn_forward,
                                    lambda_reg=0.01, block_b=16,
                                    mxu_dtype=jnp.bfloat16))
    logits, out_labels, total_loss, weighted_adj = fwd(node_feat, labels, adjs,
                                                       params)
    jax.block_until_ready((logits, out_labels, total_loss, weighted_adj))

    assert logits.shape == (B, num_classes)
    assert weighted_adj.shape == (B, N, N)
    assert bool(jnp.isfinite(total_loss))
    assert bool(jnp.all(jnp.isfinite(logits)))
    print("KERNEL_OK")
</pallas_src>

<mosaic_0001>
module attributes {stable_mosaic.version = 11 : i64} {
  func.func @edge_gnn_kernel(%arg0: i32, %arg1: memref<128x16xf32, #tpu.memory_space<vmem>>, %arg2: memref<128x128xf32, #tpu.memory_space<vmem>>, %arg3: memref<16x32xbf16, #tpu.memory_space<vmem>>, %arg4: memref<32x32xbf16, #tpu.memory_space<vmem>>, %arg5: memref<16x32xbf16, #tpu.memory_space<vmem>>, %arg6: memref<32x16xbf16, #tpu.memory_space<vmem>>, %arg7: memref<16x4xbf16, #tpu.memory_space<vmem>>, %arg8: memref<8x32xf32, #tpu.memory_space<vmem>>, %arg9: memref<16x128xf32, #tpu.memory_space<vmem>>, %arg10: memref<128x128xf32, #tpu.memory_space<vmem>>, %arg11: memref<1x1x128xf32, #tpu.memory_space<vmem>>) attributes {dimension_semantics = [#tpu.dimension_semantics<parallel>], iteration_bounds = array<i64: 2>, scalar_prefetch = 0 : i64, scratch_operands = 0 : i64, tpu.core_type = #tpu.core_type<tc>, window_params = [{transform_indices = @transform_0, window_bounds = array<i64: 128, 16>}, {transform_indices = @transform_1, window_bounds = array<i64: 128, 128>}, {pipeline_mode = #tpu.pipeline_mode<synchronous>, transform_indices = @transform_2, window_bounds = array<i64: 16, 32>}, {pipeline_mode = #tpu.pipeline_mode<synchronous>, transform_indices = @transform_3, window_bounds = array<i64: 32, 32>}, {pipeline_mode = #tpu.pipeline_mode<synchronous>, transform_indices = @transform_4, window_bounds = array<i64: 16, 32>}, {pipeline_mode = #tpu.pipeline_mode<synchronous>, transform_indices = @transform_5, window_bounds = array<i64: 32, 16>}, {pipeline_mode = #tpu.pipeline_mode<synchronous>, transform_indices = @transform_6, window_bounds = array<i64: 16, 4>}, {pipeline_mode = #tpu.pipeline_mode<synchronous>, transform_indices = @transform_7, window_bounds = array<i64: 8, 32>}, {transform_indices = @transform_8, window_bounds = array<i64: 16, 128>}, {transform_indices = @transform_9, window_bounds = array<i64: 128, 128>}, {transform_indices = @transform_10, window_bounds = array<i64: 1, 1, 128>}]} {
    %c0 = arith.constant 0 : index
    %c0_0 = arith.constant 0 : index
    %0 = vector.load %arg1[%c0, %c0_0] : memref<128x16xf32, #tpu.memory_space<vmem>>, vector<128x16xf32>
    %c0_1 = arith.constant 0 : index
    %c0_2 = arith.constant 0 : index
    %1 = vector.load %arg2[%c0_1, %c0_2] : memref<128x128xf32, #tpu.memory_space<vmem>>, vector<128x128xf32>
    %c0_3 = arith.constant 0 : index
    %c0_4 = arith.constant 0 : index
    %2 = vector.load %arg8[%c0_3, %c0_4] : memref<8x32xf32, #tpu.memory_space<vmem>>, vector<1x32xf32>
    %c1 = arith.constant 1 : index
    %c0_5 = arith.constant 0 : index
    %3 = vector.load %arg8[%c1, %c0_5] : memref<8x32xf32, #tpu.memory_space<vmem>>, vector<1x32xf32>
    %c2 = arith.constant 2 : index
    %c0_6 = arith.constant 0 : index
    %4 = vector.load %arg8[%c2, %c0_6] : memref<8x32xf32, #tpu.memory_space<vmem>>, vector<1x32xf32>
    %c3 = arith.constant 3 : index
    %c0_7 = arith.constant 0 : index
    %5 = vector.load %arg8[%c3, %c0_7] : memref<8x32xf32, #tpu.memory_space<vmem>>, vector<1x16xf32>
    %c4 = arith.constant 4 : index
    %c0_8 = arith.constant 0 : index
    %6 = vector.load %arg8[%c4, %c0_8] : memref<8x32xf32, #tpu.memory_space<vmem>>, vector<1x16xf32>
    %c5 = arith.constant 5 : index
    %c0_9 = arith.constant 0 : index
    %7 = vector.load %arg8[%c5, %c0_9] : memref<8x32xf32, #tpu.memory_space<vmem>>, vector<1x16xf32>
    %c6 = arith.constant 6 : index
    %c0_10 = arith.constant 0 : index
    %8 = vector.load %arg8[%c6, %c0_10] : memref<8x32xf32, #tpu.memory_space<vmem>>, vector<1x4xf32>
    %9 = arith.mulf %0, %0 : vector<128x16xf32>
    %cst = arith.constant dense<0.000000e+00> : vector<128xf32>
    %10 = vector.multi_reduction <add>, %9, %cst [1] : vector<128x16xf32> to vector<128xf32>
    %11 = vector.shape_cast %10 : vector<128xf32> to vector<128x1xf32>
    %cst_11 = arith.constant 1.000000e-24 : f32
    %12 = vector.broadcast %cst_11 : f32 to vector<128x1xf32>
    %13 = arith.maximumf %11, %12 : vector<128x1xf32>
    %14 = math.rsqrt %13 : vector<128x1xf32>
    %15 = vector.broadcast %14 : vector<128x1xf32> to vector<128x16xf32>
    %16 = arith.mulf %0, %15 : vector<128x16xf32>
    %c0_12 = arith.constant 0 : index
    %c0_13 = arith.constant 0 : index
    %17 = vector.load %arg3[%c0_12, %c0_13] : memref<16x32xbf16, #tpu.memory_space<vmem>>, vector<16x32xbf16>
    %18 = arith.truncf %16 : vector<128x16xf32> to vector<128x16xbf16>
    %cst_14 = arith.constant dense<0.000000e+00> : vector<128x32xf32>
    %19 = tpu.matmul %18, %17, %cst_14 {dimension_numbers = #tpu.dot_dimension_numbers<[1], [0], [0], [1], [0, 0, 1, 1], [], []>} : vector<128x16xbf16>, vector<16x32xbf16>, vector<128x32xf32> -> vector<128x32xf32>
    %20 = vector.broadcast %2 : vector<1x32xf32> to vector<128x32xf32>
    %21 = arith.addf %19, %20 : vector<128x32xf32>
    %cst_15 = arith.constant 0.000000e+00 : f32
    %22 = vector.broadcast %cst_15 : f32 to vector<128x32xf32>
    %23 = arith.maximumf %21, %22 : vector<128x32xf32>
    %c0_16 = arith.constant 0 : index
    %c0_17 = arith.constant 0 : index
    %24 = vector.load %arg4[%c0_16, %c0_17] : memref<32x32xbf16, #tpu.memory_space<vmem>>, vector<32x32xbf16>
    %25 = arith.truncf %23 : vector<128x32xf32> to vector<128x32xbf16>
    %cst_18 = arith.constant dense<0.000000e+00> : vector<128x32xf32>
    %26 = tpu.matmul %25, %24, %cst_18 {dimension_numbers = #tpu.dot_dimension_numbers<[1], [0], [0], [1], [0, 0, 1, 1], [], []>} : vector<128x32xbf16>, vector<32x32xbf16>, vector<128x32xf32> -> vector<128x32xf32>
    %27 = vector.broadcast %3 : vector<1x32xf32> to vector<128x32xf32>
    %28 = arith.addf %26, %27 : vector<128x32xf32>
    %cst_19 = arith.constant 0.000000e+00 : f32
    %29 = vector.broadcast %cst_19 : f32 to vector<128x32xf32>
    %30 = arith.maximumf %28, %29 : vector<128x32xf32>
    %31 = arith.truncf %30 : vector<128x32xf32> to vector<128x32xbf16>
    %cst_20 = arith.constant dense<0.000000e+00> : vector<128x128xf32>
    %32 = tpu.matmul %31, %31, %cst_20 {dimension_numbers = #tpu.dot_dimension_numbers<[1], [1], [0], [0], [0, 0, 1, 0], [], []>} : vector<128x32xbf16>, vector<128x32xbf16>, vector<128x128xf32> -> vector<128x128xf32>
    %cst_21 = arith.constant 0.176776692 : f32
    %33 = vector.broadcast %cst_21 : f32 to vector<128x128xf32>
    %34 = arith.mulf %32, %33 : vector<128x128xf32>
    %35 = arith.negf %34 : vector<128x128xf32>
    %36 = math.exp %35 : vector<128x128xf32>
    %cst_22 = arith.constant 1.000000e+00 : f32
    %37 = vector.broadcast %cst_22 : f32 to vector<128x128xf32>
    %38 = arith.addf %37, %36 : vector<128x128xf32>
    %39 = arith.divf %37, %38 : vector<128x128xf32>
    %40 = arith.mulf %1, %39 : vector<128x128xf32>
    %cst_23 = arith.constant 1.000000e+00 : f32
    %41 = vector.broadcast %cst_23 : f32 to vector<128x1xf32>
    %42 = tpu.concatenate %16, %41 in 1 : vector<128x16xf32>, vector<128x1xf32> -> vector<128x17xf32>
    %43 = arith.truncf %40 : vector<128x128xf32> to vector<128x128xbf16>
    %44 = arith.truncf %42 : vector<128x17xf32> to vector<128x17xbf16>
    %cst_24 = arith.constant dense<0.000000e+00> : vector<128x17xf32>
    %45 = tpu.matmul %43, %44, %cst_24 {dimension_numbers = #tpu.dot_dimension_numbers<[1], [0], [0], [1], [0, 0, 1, 1], [], []>} : vector<128x128xbf16>, vector<128x17xbf16>, vector<128x17xf32> -> vector<128x17xf32>
    %46 = vector.extract_strided_slice %45 {offsets = [0, 16], sizes = [128, 1], strides = [1, 1]} : vector<128x17xf32> to vector<128x1xf32>
    %47 = vector.extract_strided_slice %45 {offsets = [0, 0], sizes = [128, 16], strides = [1, 1]} : vector<128x17xf32> to vector<128x16xf32>
    %cst_25 = arith.constant 9.99999993E-9 : f32
    %48 = vector.broadcast %cst_25 : f32 to vector<128x1xf32>
    %49 = arith.addf %46, %48 : vector<128x1xf32>
    %50 = tpu.reciprocal %49 {approx = true} : vector<128x1xf32> -> vector<128x1xf32>
    %51 = vector.broadcast %50 : vector<128x1xf32> to vector<128x16xf32>
    %52 = arith.mulf %47, %51 : vector<128x16xf32>
    %c0_26 = arith.constant 0 : index
    %c0_27 = arith.constant 0 : index
    %53 = vector.load %arg5[%c0_26, %c0_27] : memref<16x32xbf16, #tpu.memory_space<vmem>>, vector<16x32xbf16>
    %54 = arith.truncf %52 : vector<128x16xf32> to vector<128x16xbf16>
    %cst_28 = arith.constant dense<0.000000e+00> : vector<128x32xf32>
    %55 = tpu.matmul %54, %53, %cst_28 {dimension_numbers = #tpu.dot_dimension_numbers<[1], [0], [0], [1], [0, 0, 1, 1], [], []>} : vector<128x16xbf16>, vector<16x32xbf16>, vector<128x32xf32> -> vector<128x32xf32>
    %56 = vector.broadcast %4 : vector<1x32xf32> to vector<128x32xf32>
    %57 = arith.addf %55, %56 : vector<128x32xf32>
    %cst_29 = arith.constant 0.000000e+00 : f32
    %58 = vector.broadcast %cst_29 : f32 to vector<128x32xf32>
    %59 = arith.maximumf %57, %58 : vector<128x32xf32>
    %60 = vector.shape_cast %46 : vector<128x1xf32> to vector<16x8x1xf32>
    %61 = vector.shape_cast %59 : vector<128x32xf32> to vector<16x8x32xf32>
    %cst_30 = arith.constant dense<0xFF800000> : vector<16x1xf32>
    %62 = vector.multi_reduction <maximumf>, %60, %cst_30 [1] : vector<16x8x1xf32> to vector<16x1xf32>
    %63 = vector.shape_cast %62 : vector<16x1xf32> to vector<16x1x1xf32>
    %64 = vector.broadcast %63 : vector<16x1x1xf32> to vector<16x8x1xf32>
    %65 = arith.subf %60, %64 : vector<16x8x1xf32>
    %66 = math.exp %65 : vector<16x8x1xf32>
    %cst_31 = arith.constant dense<0.000000e+00> : vector<16x1xf32>
    %67 = vector.multi_reduction <add>, %66, %cst_31 [1] : vector<16x8x1xf32> to vector<16x1xf32>
    %68 = vector.shape_cast %67 : vector<16x1xf32> to vector<16x1x1xf32>
    %cst_32 = arith.constant 9.99999993E-9 : f32
    %69 = vector.broadcast %cst_32 : f32 to vector<16x1x1xf32>
    %70 = arith.addf %68, %69 : vector<16x1x1xf32>
    %71 = tpu.reciprocal %70 {approx = true} : vector<16x1x1xf32> -> vector<16x1x1xf32>
    %72 = vector.broadcast %71 : vector<16x1x1xf32> to vector<16x8x1xf32>
    %73 = arith.mulf %66, %72 : vector<16x8x1xf32>
    %74 = vector.broadcast %73 : vector<16x8x1xf32> to vector<16x8x32xf32>
    %75 = arith.mulf %74, %61 : vector<16x8x32xf32>
    %cst_33 = arith.constant dense<0.000000e+00> : vector<16x32xf32>
    %76 = vector.multi_reduction <add>, %75, %cst_33 [1] : vector<16x8x32xf32> to vector<16x32xf32>
    %c0_34 = arith.constant 0 : index
    %c0_35 = arith.constant 0 : index
    %77 = vector.load %arg6[%c0_34, %c0_35] : memref<32x16xbf16, #tpu.memory_space<vmem>>, vector<32x16xbf16>
    %78 = arith.truncf %76 : vector<16x32xf32> to vector<16x32xbf16>
    %cst_36 = arith.constant dense<0.000000e+00> : vector<16x16xf32>
    %79 = tpu.matmul %78, %77, %cst_36 {dimension_numbers = #tpu.dot_dimension_numbers<[1], [0], [0], [1], [0, 0, 1, 1], [], []>} : vector<16x32xbf16>, vector<32x16xbf16>, vector<16x16xf32> -> vector<16x16xf32>
    %80 = vector.broadcast %5 : vector<1x16xf32> to vector<16x16xf32>
    %81 = arith.addf %79, %80 : vector<16x16xf32>
    %cst_37 = arith.constant 0.000000e+00 : f32
    %82 = vector.broadcast %cst_37 : f32 to vector<16x16xf32>
    %83 = arith.maximumf %81, %82 : vector<16x16xf32>
    %cst_38 = arith.constant dense<0.000000e+00> : vector<16xf32>
    %84 = vector.multi_reduction <add>, %83, %cst_38 [1] : vector<16x16xf32> to vector<16xf32>
    %85 = vector.shape_cast %84 : vector<16xf32> to vector<16x1xf32>
    %cst_39 = arith.constant 1.600000e+01 : f32
    %86 = vector.broadcast %cst_39 : f32 to vector<16x1xf32>
    %87 = arith.divf %85, %86 : vector<16x1xf32>
    %88 = vector.broadcast %87 : vector<16x1xf32> to vector<16x16xf32>
    %89 = arith.subf %83, %88 : vector<16x16xf32>
    %90 = arith.mulf %89, %89 : vector<16x16xf32>
    %cst_40 = arith.constant dense<0.000000e+00> : vector<16xf32>
    %91 = vector.multi_reduction <add>, %90, %cst_40 [1] : vector<16x16xf32> to vector<16xf32>
    %92 = vector.shape_cast %91 : vector<16xf32> to vector<16x1xf32>
    %cst_41 = arith.constant 1.600000e+01 : f32
    %93 = vector.broadcast %cst_41 : f32 to vector<16x1xf32>
    %94 = arith.divf %92, %93 : vector<16x1xf32>
    %95 = vector.broadcast %87 : vector<16x1xf32> to vector<16x16xf32>
    %96 = arith.subf %83, %95 : vector<16x16xf32>
    %cst_42 = arith.constant 9.99999974E-6 : f32
    %97 = vector.broadcast %cst_42 : f32 to vector<16x1xf32>
    %98 = arith.addf %94, %97 : vector<16x1xf32>
    %99 = math.rsqrt %98 : vector<16x1xf32>
    %100 = vector.broadcast %99 : vector<16x1xf32> to vector<16x16xf32>
    %101 = arith.mulf %96, %100 : vector<16x16xf32>
    %102 = vector.broadcast %6 : vector<1x16xf32> to vector<16x16xf32>
    %103 = arith.mulf %101, %102 : vector<16x16xf32>
    %104 = vector.broadcast %7 : vector<1x16xf32> to vector<16x16xf32>
    %105 = arith.addf %103, %104 : vector<16x16xf32>
    %c0_43 = arith.constant 0 : index
    %c0_44 = arith.constant 0 : index
    %106 = vector.load %arg7[%c0_43, %c0_44] : memref<16x4xbf16, #tpu.memory_space<vmem>>, vector<16x4xbf16>
    %107 = arith.truncf %105 : vector<16x16xf32> to vector<16x16xbf16>
    %cst_45 = arith.constant dense<0.000000e+00> : vector<16x4xf32>
    %108 = tpu.matmul %107, %106, %cst_45 {dimension_numbers = #tpu.dot_dimension_numbers<[1], [0], [0], [1], [0, 0, 1, 1], [], []>} : vector<16x16xbf16>, vector<16x4xbf16>, vector<16x4xf32> -> vector<16x4xf32>
    %109 = vector.broadcast %8 : vector<1x4xf32> to vector<16x4xf32>
    %110 = arith.addf %108, %109 : vector<16x4xf32>
    %cst_46 = arith.constant 0.000000e+00 : f32
    %111 = vector.broadcast %cst_46 : f32 to vector<16x124xf32>
    %112 = tpu.concatenate %110, %111 in 1 : vector<16x4xf32>, vector<16x124xf32> -> vector<16x128xf32>
    %c0_47 = arith.constant 0 : index
    %c0_48 = arith.constant 0 : index
    %113 = vector.load %arg9[%c0_47, %c0_48] : memref<16x128xf32, #tpu.memory_space<vmem>>, vector<16x128xf32>
    tpu.vector_store %arg9[%c0_47, %c0_48], %112 {strides = array<i32>} : memref<16x128xf32, #tpu.memory_space<vmem>>, vector<16x128xf32>,
    %c0_49 = arith.constant 0 : index
    %c0_50 = arith.constant 0 : index
    %114 = vector.load %arg10[%c0_49, %c0_50] : memref<128x128xf32, #tpu.memory_space<vmem>>, vector<128x128xf32>
    tpu.vector_store %arg10[%c0_49, %c0_50], %40 {strides = array<i32>} : memref<128x128xf32, #tpu.memory_space<vmem>>, vector<128x128xf32>,
    %cst_51 = arith.constant 0.000000e+00 : f32
    %115 = vector.broadcast %cst_51 : f32 to vector<1x1x128xf32>
    %116 = vector.shape_cast %40 : vector<128x128xf32> to vector<1x128x128xf32>
    %cst_52 = arith.constant dense<0.000000e+00> : vector<1xf32>
    %117 = vector.multi_reduction <add>, %116, %cst_52 [1, 2] : vector<1x128x128xf32> to vector<1xf32>
    %118 = vector.shape_cast %117 : vector<1xf32> to vector<1x1x1xf32>
    %119 = vector.extract %118[0, 0, 0] : f32 from vector<1x1x1xf32>
    %120 = vector.broadcast %119 : f32 to vector<1x1x128xf32>
    %121 = arith.addf %115, %120 : vector<1x1x128xf32>
    %c0_53 = arith.constant 0 : index
    %c0_54 = arith.constant 0 : index
    %c0_55 = arith.constant 0 : index
    %122 = vector.load %arg11[%c0_53, %c0_54, %c0_55] : memref<1x1x128xf32, #tpu.memory_space<vmem>>, vector<1x1x128xf32>
    tpu.vector_store %arg11[%c0_53, %c0_54, %c0_55], %121 {strides = array<i32>} : memref<1x1x128xf32, #tpu.memory_space<vmem>>, vector<1x1x128xf32>,
    return
  }
  func.func @transform_0(%arg0: i32) -> (i32, i32) {
    %c0_i32 = arith.constant 0 : i32
    %c0_i32_0 = arith.constant 0 : i32
    return %arg0, %c0_i32 : i32, i32
  }
  func.func @transform_1(%arg0: i32) -> (i32, i32) {
    %c0_i32 = arith.constant 0 : i32
    %c0_i32_0 = arith.constant 0 : i32
    return %arg0, %c0_i32 : i32, i32
  }
  func.func @transform_2(%arg0: i32) -> (i32, i32) {
    %c0_i32 = arith.constant 0 : i32
    %c0_i32_0 = arith.constant 0 : i32
    %c0_i32_1 = arith.constant 0 : i32
    return %c0_i32, %c0_i32_0 : i32, i32
  }
  func.func @transform_3(%arg0: i32) -> (i32, i32) {
    %c0_i32 = arith.constant 0 : i32
    %c0_i32_0 = arith.constant 0 : i32
    %c0_i32_1 = arith.constant 0 : i32
    return %c0_i32, %c0_i32_0 : i32, i32
  }
  func.func @transform_4(%arg0: i32) -> (i32, i32) {
    %c0_i32 = arith.constant 0 : i32
    %c0_i32_0 = arith.constant 0 : i32
    %c0_i32_1 = arith.constant 0 : i32
    return %c0_i32, %c0_i32_0 : i32, i32
  }
  func.func @transform_5(%arg0: i32) -> (i32, i32) {
    %c0_i32 = arith.constant 0 : i32
    %c0_i32_0 = arith.constant 0 : i32
    %c0_i32_1 = arith.constant 0 : i32
    return %c0_i32, %c0_i32_0 : i32, i32
  }
  func.func @transform_6(%arg0: i32) -> (i32, i32) {
    %c0_i32 = arith.constant 0 : i32
    %c0_i32_0 = arith.constant 0 : i32
    %c0_i32_1 = arith.constant 0 : i32
    return %c0_i32, %c0_i32_0 : i32, i32
  }
  func.func @transform_7(%arg0: i32) -> (i32, i32) {
    %c0_i32 = arith.constant 0 : i32
    %c0_i32_0 = arith.constant 0 : i32
    %c0_i32_1 = arith.constant 0 : i32
    return %c0_i32, %c0_i32_0 : i32, i32
  }
  func.func @transform_8(%arg0: i32) -> (i32, i32) {
    %c0_i32 = arith.constant 0 : i32
    %c0_i32_0 = arith.constant 0 : i32
    return %arg0, %c0_i32 : i32, i32
  }
  func.func @transform_9(%arg0: i32) -> (i32, i32) {
    %c0_i32 = arith.constant 0 : i32
    %c0_i32_0 = arith.constant 0 : i32
    return %arg0, %c0_i32 : i32, i32
  }
  func.func @transform_10(%arg0: i32) -> (i32, i32, i32) {
    %c0_i32 = arith.constant 0 : i32
    %c0_i32_0 = arith.constant 0 : i32
    %c0_i32_1 = arith.constant 0 : i32
    return %arg0, %c0_i32, %c0_i32_0 : i32, i32, i32
  }
}

</mosaic_0001>

<llo_original>
// kernel: mul.0
$region0: #{mul.0}
  #allocation0 [shape = 's32[1]{0}', space=sflag, size = 0x4, scoped, tag = 'scoped memory for mul.0']
  %s0 = inlined_call_operand.vmem [shape: f32[256,128], index: 0, kind: input, shape index: {}]
  %s1 = inlined_call_operand.vmem [shape: f32[256,128], index: 1, kind: input, shape index: {}]
  %s2 = inlined_call_operand.vmem [shape: f32[256,128], index: 2, kind: output, shape index: {}]
  %v3 = vld [vmem:[%s0] sm:$0xff]
  %v4 = vld [vmem:[%s1] sm:$0xff]
  %5 = xla_tuple %v3, %v4
  %6 = xla_tuple %5
  %v7 = vmul.f32 %v3, %v4
  %8 = xla_tuple %v7
  %9 = vst [vmem:[%s2] sm:$0xff] %v7
  %s10 = scalar_lea.vmem %s0, 8
  %v11 = vld [vmem:[%s10] sm:$0xff]
  %s12 = scalar_lea.vmem %s1, 8
  %v13 = vld [vmem:[%s12] sm:$0xff]
  %14 = xla_tuple %v11, %v13
  %15 = xla_tuple %14
  %v16 = vmul.f32 %v11, %v13
  %17 = xla_tuple %v16
  %s18 = scalar_lea.vmem %s2, 8
  %19 = vst [vmem:[%s18] sm:$0xff] %v16
  %s20 = scalar_lea.vmem %s0, 16
  %v21 = vld [vmem:[%s20] sm:$0xff]
  %s22 = scalar_lea.vmem %s1, 16
  %v23 = vld [vmem:[%s22] sm:$0xff]
  %24 = xla_tuple %v21, %v23
  %25 = xla_tuple %24
  %v26 = vmul.f32 %v21, %v23
  %27 = xla_tuple %v26
  %s28 = scalar_lea.vmem %s2, 16
  %29 = vst [vmem:[%s28] sm:$0xff] %v26
  %s30 = scalar_lea.vmem %s0, 24
  %v31 = vld [vmem:[%s30] sm:$0xff]
  %s32 = scalar_lea.vmem %s1, 24
  %v33 = vld [vmem:[%s32] sm:$0xff]
  %34 = xla_tuple %v31, %v33
  %35 = xla_tuple %34
  %v36 = vmul.f32 %v31, %v33
  %37 = xla_tuple %v36
  %s38 = scalar_lea.vmem %s2, 24
  %39 = vst [vmem:[%s38] sm:$0xff] %v36
  %s40 = scalar_lea.vmem %s0, 32
  %v41 = vld [vmem:[%s40] sm:$0xff]
  %s42 = scalar_lea.vmem %s1, 32
  %v43 = vld [vmem:[%s42] sm:$0xff]
  %44 = xla_tuple %v41, %v43
  %45 = xla_tuple %44
  %v46 = vmul.f32 %v41, %v43
  %47 = xla_tuple %v46
  %s48 = scalar_lea.vmem %s2, 32
  %49 = vst [vmem:[%s48] sm:$0xff] %v46
  %s50 = scalar_lea.vmem %s0, 40
  %v51 = vld [vmem:[%s50] sm:$0xff]
  %s52 = scalar_lea.vmem %s1, 40
  %v53 = vld [vmem:[%s52] sm:$0xff]
  %54 = xla_tuple %v51, %v53
  %55 = xla_tuple %54
  %v56 = vmul.f32 %v51, %v53
  %57 = xla_tuple %v56
  %s58 = scalar_lea.vmem %s2, 40
  %59 = vst [vmem:[%s58] sm:$0xff] %v56
  %s60 = scalar_lea.vmem %s0, 48
  %v61 = vld [vmem:[%s60] sm:$0xff]
  %s62 = scalar_lea.vmem %s1, 48
  %v63 = vld [vmem:[%s62] sm:$0xff]
  %64 = xla_tuple %v61, %v63
  %65 = xla_tuple %64
  %v66 = vmul.f32 %v61, %v63
  %67 = xla_tuple %v66
  %s68 = scalar_lea.vmem %s2, 48
  %69 = vst [vmem:[%s68] sm:$0xff] %v66
  %s70 = scalar_lea.vmem %s0, 56
  %v71 = vld [vmem:[%s70] sm:$0xff]
  %s72 = scalar_lea.vmem %s1, 56
  %v73 = vld [vmem:[%s72] sm:$0xff]
  %74 = xla_tuple %v71, %v73
  %75 = xla_tuple %74
  %v76 = vmul.f32 %v71, %v73
  %77 = xla_tuple %v76
  %s78 = scalar_lea.vmem %s2, 56
  %79 = vst [vmem:[%s78] sm:$0xff] %v76
  %s80 = scalar_lea.vmem %s0, 64
  %v81 = vld [vmem:[%s80] sm:$0xff]
  %s82 = scalar_lea.vmem %s1, 64
  %v83 = vld [vmem:[%s82] sm:$0xff]
  %84 = xla_tuple %v81, %v83
  %85 = xla_tuple %84
  %v86 = vmul.f32 %v81, %v83
  %87 = xla_tuple %v86
  %s88 = scalar_lea.vmem %s2, 64
  %89 = vst [vmem:[%s88] sm:$0xff] %v86
  %s90 = scalar_lea.vmem %s0, 72
  %v91 = vld [vmem:[%s90] sm:$0xff]
  %s92 = scalar_lea.vmem %s1, 72
  %v93 = vld [vmem:[%s92] sm:$0xff]
  %94 = xla_tuple %v91, %v93
  %95 = xla_tuple %94
  %v96 = vmul.f32 %v91, %v93
  %97 = xla_tuple %v96
  %s98 = scalar_lea.vmem %s2, 72
  %99 = vst [vmem:[%s98] sm:$0xff] %v96
  %s100 = scalar_lea.vmem %s0, 80
  %v101 = vld [vmem:[%s100] sm:$0xff]
  %s102 = scalar_lea.vmem %s1, 80
  %v103 = vld [vmem:[%s102] sm:$0xff]
  %104 = xla_tuple %v101, %v103
  %105 = xla_tuple %104
  %v106 = vmul.f32 %v101, %v103
  %107 = xla_tuple %v106
  %s108 = scalar_lea.vmem %s2, 80
  %109 = vst [vmem:[%s108] sm:$0xff] %v106
  %s110 = scalar_lea.vmem %s0, 88
  %v111 = vld [vmem:[%s110] sm:$0xff]
  %s112 = scalar_lea.vmem %s1, 88
  %v113 = vld [vmem:[%s112] sm:$0xff]
  %114 = xla_tuple %v111, %v113
  %115 = xla_tuple %114
  %v116 = vmul.f32 %v111, %v113
  %117 = xla_tuple %v116
  %s118 = scalar_lea.vmem %s2, 88
  %119 = vst [vmem:[%s118] sm:$0xff] %v116
  %s120 = scalar_lea.vmem %s0, 96
  %v121 = vld [vmem:[%s120] sm:$0xff]
  %s122 = scalar_lea.vmem %s1, 96
  %v123 = vld [vmem:[%s122] sm:$0xff]
  %124 = xla_tuple %v121, %v123
  %125 = xla_tuple %124
  %v126 = vmul.f32 %v121, %v123
  %127 = xla_tuple %v126
  %s128 = scalar_lea.vmem %s2, 96
  %129 = vst [vmem:[%s128] sm:$0xff] %v126
  %s130 = scalar_lea.vmem %s0, 104
  %v131 = vld [vmem:[%s130] sm:$0xff]
  %s132 = scalar_lea.vmem %s1, 104
  %v133 = vld [vmem:[%s132] sm:$0xff]
  %134 = xla_tuple %v131, %v133
  %135 = xla_tuple %134
  %v136 = vmul.f32 %v131, %v133
  %137 = xla_tuple %v136
  %s138 = scalar_lea.vmem %s2, 104
  %139 = vst [vmem:[%s138] sm:$0xff] %v136
  %s140 = scalar_lea.vmem %s0, 112
  %v141 = vld [vmem:[%s140] sm:$0xff]
  %s142 = scalar_lea.vmem %s1, 112
  %v143 = vld [vmem:[%s142] sm:$0xff]
  %144 = xla_tuple %v141, %v143
  %145 = xla_tuple %144
  %v146 = vmul.f32 %v141, %v143
  %147 = xla_tuple %v146
  %s148 = scalar_lea.vmem %s2, 112
  %149 = vst [vmem:[%s148] sm:$0xff] %v146
  %s150 = scalar_lea.vmem %s0, 120
  %v151 = vld [vmem:[%s150] sm:$0xff]
  %s152 = scalar_lea.vmem %s1, 120
  %v153 = vld [vmem:[%s152] sm:$0xff]
  %154 = xla_tuple %v151, %v153
  %155 = xla_tuple %154
  %v156 = vmul.f32 %v151, %v153
  %157 = xla_tuple %v156
  %s158 = scalar_lea.vmem %s2, 120
  %159 = vst [vmem:[%s158] sm:$0xff] %v156
  %s160 = scalar_lea.vmem %s0, 128
  %v161 = vld [vmem:[%s160] sm:$0xff]
  %s162 = scalar_lea.vmem %s1, 128
  %v163 = vld [vmem:[%s162] sm:$0xff]
  %164 = xla_tuple %v161, %v163
  %165 = xla_tuple %164
  %v166 = vmul.f32 %v161, %v163
  %167 = xla_tuple %v166
  %s168 = scalar_lea.vmem %s2, 128
  %169 = vst [vmem:[%s168] sm:$0xff] %v166
  %s170 = scalar_lea.vmem %s0, 136
  %v171 = vld [vmem:[%s170] sm:$0xff]
  %s172 = scalar_lea.vmem %s1, 136
  %v173 = vld [vmem:[%s172] sm:$0xff]
  %174 = xla_tuple %v171, %v173
  %175 = xla_tuple %174
  %v176 = vmul.f32 %v171, %v173
  %177 = xla_tuple %v176
  %s178 = scalar_lea.vmem %s2, 136
  %179 = vst [vmem:[%s178] sm:$0xff] %v176
  %s180 = scalar_lea.vmem %s0, 144
  %v181 = vld [vmem:[%s180] sm:$0xff]
  %s182 = scalar_lea.vmem %s1, 144
  %v183 = vld [vmem:[%s182] sm:$0xff]
  %184 = xla_tuple %v181, %v183
  %185 = xla_tuple %184
  %v186 = vmul.f32 %v181, %v183
  %187 = xla_tuple %v186
  %s188 = scalar_lea.vmem %s2, 144
  %189 = vst [vmem:[%s188] sm:$0xff] %v186
  %s190 = scalar_lea.vmem %s0, 152
  %v191 = vld [vmem:[%s190] sm:$0xff]
  %s192 = scalar_lea.vmem %s1, 152
  %v193 = vld [vmem:[%s192] sm:$0xff]
  %194 = xla_tuple %v191, %v193
  %195 = xla_tuple %194
  %v196 = vmul.f32 %v191, %v193
  %197 = xla_tuple %v196
  %s198 = scalar_lea.vmem %s2, 152
  %199 = vst [vmem:[%s198] sm:$0xff] %v196
  %s200 = scalar_lea.vmem %s0, 160
  %v201 = vld [vmem:[%s200] sm:$0xff]
  %s202 = scalar_lea.vmem %s1, 160
  %v203 = vld [vmem:[%s202] sm:$0xff]
  %204 = xla_tuple %v201, %v203
  %205 = xla_tuple %204
  %v206 = vmul.f32 %v201, %v203
  %207 = xla_tuple %v206
  %s208 = scalar_lea.vmem %s2, 160
  %209 = vst [vmem:[%s208] sm:$0xff] %v206
  %s210 = scalar_lea.vmem %s0, 168
  %v211 = vld [vmem:[%s210] sm:$0xff]
  %s212 = scalar_lea.vmem %s1, 168
  %v213 = vld [vmem:[%s212] sm:$0xff]
  %214 = xla_tuple %v211, %v213
  %215 = xla_tuple %214
  %v216 = vmul.f32 %v211, %v213
  %217 = xla_tuple %v216
  %s218 = scalar_lea.vmem %s2, 168
  %219 = vst [vmem:[%s218] sm:$0xff] %v216
  %s220 = scalar_lea.vmem %s0, 176
  %v221 = vld [vmem:[%s220] sm:$0xff]
  %s222 = scalar_lea.vmem %s1, 176
  %v223 = vld [vmem:[%s222] sm:$0xff]
  %224 = xla_tuple %v221, %v223
  %225 = xla_tuple %224
  %v226 = vmul.f32 %v221, %v223
  %227 = xla_tuple %v226
  %s228 = scalar_lea.vmem %s2, 176
  %229 = vst [vmem:[%s228] sm:$0xff] %v226
  %s230 = scalar_lea.vmem %s0, 184
  %v231 = vld [vmem:[%s230] sm:$0xff]
  %s232 = scalar_lea.vmem %s1, 184
  %v233 = vld [vmem:[%s232] sm:$0xff]
  %234 = xla_tuple %v231, %v233
  %235 = xla_tuple %234
  %v236 = vmul.f32 %v231, %v233
  %237 = xla_tuple %v236
  %s238 = scalar_lea.vmem %s2, 184
  %239 = vst [vmem:[%s238] sm:$0xff] %v236
  %s240 = scalar_lea.vmem %s0, 192
  %v241 = vld [vmem:[%s240] sm:$0xff]
  %s242 = scalar_lea.vmem %s1, 192
  %v243 = vld [vmem:[%s242] sm:$0xff]
  %244 = xla_tuple %v241, %v243
  %245 = xla_tuple %244
  %v246 = vmul.f32 %v241, %v243
  %247 = xla_tuple %v246
  %s248 = scalar_lea.vmem %s2, 192
  %249 = vst [vmem:[%s248] sm:$0xff] %v246
  %s250 = scalar_lea.vmem %s0, 200
  %v251 = vld [vmem:[%s250] sm:$0xff]
  %s252 = scalar_lea.vmem %s1, 200
  %v253 = vld [vmem:[%s252] sm:$0xff]
  %254 = xla_tuple %v251, %v253
  %255 = xla_tuple %254
  %v256 = vmul.f32 %v251, %v253
  %257 = xla_tuple %v256
  %s258 = scalar_lea.vmem %s2, 200
  %259 = vst [vmem:[%s258] sm:$0xff] %v256
  %s260 = scalar_lea.vmem %s0, 208
  %v261 = vld [vmem:[%s260] sm:$0xff]
  %s262 = scalar_lea.vmem %s1, 208
  %v263 = vld [vmem:[%s262] sm:$0xff]
  %264 = xla_tuple %v261, %v263
  %265 = xla_tuple %264
  %v266 = vmul.f32 %v261, %v263
  %267 = xla_tuple %v266
  %s268 = scalar_lea.vmem %s2, 208
  %269 = vst [vmem:[%s268] sm:$0xff] %v266
  %s270 = scalar_lea.vmem %s0, 216
  %v271 = vld [vmem:[%s270] sm:$0xff]
  %s272 = scalar_lea.vmem %s1, 216
  %v273 = vld [vmem:[%s272] sm:$0xff]
  %274 = xla_tuple %v271, %v273
  %275 = xla_tuple %274
  %v276 = vmul.f32 %v271, %v273
  %277 = xla_tuple %v276
  %s278 = scalar_lea.vmem %s2, 216
  %279 = vst [vmem:[%s278] sm:$0xff] %v276
  %s280 = scalar_lea.vmem %s0, 224
  %v281 = vld [vmem:[%s280] sm:$0xff]
  %s282 = scalar_lea.vmem %s1, 224
  %v283 = vld [vmem:[%s282] sm:$0xff]
  %284 = xla_tuple %v281, %v283
  %285 = xla_tuple %284
  %v286 = vmul.f32 %v281, %v283
  %287 = xla_tuple %v286
  %s288 = scalar_lea.vmem %s2, 224
  %289 = vst [vmem:[%s288] sm:$0xff] %v286
  %s290 = scalar_lea.vmem %s0, 232
  %v291 = vld [vmem:[%s290] sm:$0xff]
  %s292 = scalar_lea.vmem %s1, 232
  %v293 = vld [vmem:[%s292] sm:$0xff]
  %294 = xla_tuple %v291, %v293
  %295 = xla_tuple %294
  %v296 = vmul.f32 %v291, %v293
  %297 = xla_tuple %v296
  %s298 = scalar_lea.vmem %s2, 232
  %299 = vst [vmem:[%s298] sm:$0xff] %v296
  %s300 = scalar_lea.vmem %s0, 240
  %v301 = vld [vmem:[%s300] sm:$0xff]
  %s302 = scalar_lea.vmem %s1, 240
  %v303 = vld [vmem:[%s302] sm:$0xff]
  %304 = xla_tuple %v301, %v303
  %305 = xla_tuple %304
  %v306 = vmul.f32 %v301, %v303
  %307 = xla_tuple %v306
  %s308 = scalar_lea.vmem %s2, 240
  %309 = vst [vmem:[%s308] sm:$0xff] %v306
  %s310 = scalar_lea.vmem %s0, 248
  %v311 = vld [vmem:[%s310] sm:$0xff]
  %s312 = scalar_lea.vmem %s1, 248
  %v313 = vld [vmem:[%s312] sm:$0xff]
  %314 = xla_tuple %v311, %v313
  %315 = xla_tuple %314
  %v316 = vmul.f32 %v311, %v313
  %317 = xla_tuple %v316
  %s318 = scalar_lea.vmem %s2, 248
  %319 = vst [vmem:[%s318] sm:$0xff] %v316

// kernel: improved_edge_gnn_forward.1
$region0: #{improved_edge_gnn_forward.1}
  #allocation0 [shape = 'u32[]', space=smem, size = 0x4, offset = 0x4, fixed_abs, tag = 'smem constant byte address 0x4 - core index']
  #allocation1 [shape = 'u32[144,128]{1,0:T(1,128)}', space=vmem, size = 0x12000, scoped, tag = 'internal scratch']
  %s0 = inlined_call_operand.vmem [shape: f32[256,16], index: 0, kind: input, shape index: {}]
  %s1 = inlined_call_operand.vmem [shape: f32[256,128], index: 1, kind: input, shape index: {}]
  %s2 = inlined_call_operand.vmem [shape: bf16[16,32], index: 2, kind: input, shape index: {}]
  %s3 = inlined_call_operand.vmem [shape: bf16[32,32], index: 3, kind: input, shape index: {}]
  %s4 = inlined_call_operand.vmem [shape: bf16[16,32], index: 4, kind: input, shape index: {}]
  %s5 = inlined_call_operand.vmem [shape: bf16[32,16], index: 5, kind: input, shape index: {}]
  %s6 = inlined_call_operand.vmem [shape: bf16[16,4], index: 6, kind: input, shape index: {}]
  %s7 = inlined_call_operand.vmem [shape: f32[8,32], index: 7, kind: input, shape index: {}]
  %s8 = inlined_call_operand.vmem [shape: f32[32,128], index: 8, kind: output, shape index: {0}]
  %s9 = inlined_call_operand.vmem [shape: f32[256,128], index: 9, kind: output, shape index: {1}]
  %s10 = inlined_call_operand.vmem [shape: f32[2,1,128], index: 10, kind: output, shape index: {2}]
  %11 = xla_tuple %s8, %s9, %s10
  %s12 = sld [smem:[#allocation0]]
  $region81: #{improved_edge_gnn_forward.1} parent=0
    _
  %s14 = ssub.s32 1, %s12
  %s15 = scalar_select 0, %s14, %s12
  loop: start=0, step=1, limit=4
  $region2: #{improved_edge_gnn_forward.1} parent=0 // loop_pre_header
    _
  $region3: #{improved_edge_gnn_forward.1} parent=0 // loop_header
    %s17 = sphi 0, %s21
    %p18 = scmp.ge.s32.totalorder %s17, 4
    %s27 = sphi 0, %s29
    %s30 = sphi 0, %s27
    %s31 = sphi 0, %s30
    %s47 = sphi 0, %s31
    %s53 = sphi 0, %s55
    %s56 = sphi 0, %s53
    %s57 = sphi 0, %s56
    %s73 = sphi 0, %s57
    %s77 = sphi 0, %s77
    %s79 = sphi 0, %s77
    %s80 = sphi 0, %s79
    %s94 = sphi 0, %s80
    %s98 = sphi 0, %s98
    %s100 = sphi 0, %s98
    %s101 = sphi 0, %s100
    %s115 = sphi 0, %s101
    %s119 = sphi 0, %s119
    %s121 = sphi 0, %s119
    %s122 = sphi 0, %s121
    %s136 = sphi 0, %s122
    %s140 = sphi 0, %s140
    %s142 = sphi 0, %s140
    %s143 = sphi 0, %s142
    %s157 = sphi 0, %s143
    %s161 = sphi 0, %s161
    %s163 = sphi 0, %s161
    %s164 = sphi 0, %s163
    %s178 = sphi 0, %s164
    %s182 = sphi 0, %s182
    %s184 = sphi 0, %s182
    %s185 = sphi 0, %s184
    %s199 = sphi 0, %s185
    %s205 = sphi 0, %s207
    %s208 = sphi 0, %s205
    %s209 = sphi 0, %s208
    %s225 = sphi 0, %s209
    %s231 = sphi 0, %s233
    %s234 = sphi 0, %s231
    %s235 = sphi 0, %s234
    %s251 = sphi 0, %s235
    %s257 = sphi 0, %s259
    %s260 = sphi 0, %s257
    %s261 = sphi 0, %s260
    %s277 = sphi 0, %s261
  $region4: #{improved_edge_gnn_forward.1} parent=0 // loop_header_branch
    %20 = sbr.rel (%p18) target = $region8
  $region5: #{improved_edge_gnn_forward.1} parent=0 // loop_body
    %s22 = ssub.s32 %s17, 1
    %s23 = ssub.s32 %s17, 2
    %s24 = sadd.s32 %s17, 1
    %s25 = ssub.s32 %s17, %s24
    %p26 = scmp.eq.s32.totalorder %s25, 0
    %s28 = sadd.s32 %s27, 1
    %s29 = scalar_select %p26, %s27, %s28
    %p32 = pneg %p26
    %p33 = scmp.eq.s32.totalorder %s17, 1
    %p34 = por %p32, %p33
    %p35 = scmp.ne.s32.totalorder %s27, %s30
    %p36 = scmp.eq.s32.totalorder %s17, 0
    %p37 = por %p35, %p36
    %p38 = scmp.ne.s32.totalorder %s27, %s30
    %p39 = scmp.eq.s32.totalorder %s22, 1
    %p40 = por %p38, %p39
    %p41 = scmp.ne.s32.totalorder %s30, %s31
    %p42 = scmp.eq.s32.totalorder %s22, 0
    %p43 = por %p41, %p42
    %p44 = scmp.ne.s32.totalorder %s30, %s31
    %p45 = scmp.eq.s32.totalorder %s23, 1
    %p46 = por %p44, %p45
    %p48 = scmp.ne.s32.totalorder %s31, %s47
    %p49 = scmp.eq.s32.totalorder %s23, 0
    %p50 = por %p48, %p49
    %s51 = ssub.s32 %s17, %s24
    %p52 = scmp.eq.s32.totalorder %s51, 0
    %s54 = sadd.s32 %s53, 1
    %s55 = scalar_select %p52, %s53, %s54
    %p58 = pneg %p52
    %p59 = scmp.eq.s32.totalorder %s17, 1
    %p60 = por %p58, %p59
    %p61 = scmp.ne.s32.totalorder %s53, %s56
    %p62 = scmp.eq.s32.totalorder %s17, 0
    %p63 = por %p61, %p62
    %p64 = scmp.ne.s32.totalorder %s53, %s56
    %p65 = scmp.eq.s32.totalorder %s22, 1
    %p66 = por %p64, %p65
    %p67 = scmp.ne.s32.totalorder %s56, %s57
    %p68 = scmp.eq.s32.totalorder %s22, 0
    %p69 = por %p67, %p68
    %p70 = scmp.ne.s32.totalorder %s56, %s57
    %p71 = scmp.eq.s32.totalorder %s23, 1
    %p72 = por %p70, %p71
    %p74 = scmp.ne.s32.totalorder %s57, %s73
    %p75 = scmp.eq.s32.totalorder %s23, 0
    %p76 = por %p74, %p75
    %s78 = sadd.s32 %s77, 1
    %p81 = scmp.eq.s32.totalorder %s17, 1
    %p82 = scmp.ne.s32.totalorder %s77, %s79
    %p83 = scmp.eq.s32.totalorder %s17, 0
    %p84 = por %p82, %p83
    %p85 = scmp.ne.s32.totalorder %s77, %s79
    %p86 = scmp.eq.s32.totalorder %s22, 1
    %p87 = por %p85, %p86
    %p88 = scmp.ne.s32.totalorder %s79, %s80
    %p89 = scmp.eq.s32.totalorder %s22, 0
    %p90 = por %p88, %p89
    %p91 = scmp.ne.s32.totalorder %s79, %s80
    %p92 = scmp.eq.s32.totalorder %s23, 1
    %p93 = por %p91, %p92
    %p95 = scmp.ne.s32.totalorder %s80, %s94
    %p96 = scmp.eq.s32.totalorder %s23, 0
    %p97 = por %p95, %p96
    %s99 = sadd.s32 %s98, 1
    %p102 = scmp.eq.s32.totalorder %s17, 1
    %p103 = scmp.ne.s32.totalorder %s98, %s100
    %p104 = scmp.eq.s32.totalorder %s17, 0
    %p105 = por %p103, %p104
    %p106 = scmp.ne.s32.totalorder %s98, %s100
    %p107 = scmp.eq.s32.totalorder %s22, 1
    %p108 = por %p106, %p107
    %p109 = scmp.ne.s32.totalorder %s100, %s101
    %p110 = scmp.eq.s32.totalorder %s22, 0
    %p111 = por %p109, %p110
    %p112 = scmp.ne.s32.totalorder %s100, %s101
    %p113 = scmp.eq.s32.totalorder %s23, 1
    %p114 = por %p112, %p113
    %p116 = scmp.ne.s32.totalorder %s101, %s115
    %p117 = scmp.eq.s32.totalorder %s23, 0
    %p118 = por %p116, %p117
    %s120 = sadd.s32 %s119, 1
    %p123 = scmp.eq.s32.totalorder %s17, 1
    %p124 = scmp.ne.s32.totalorder %s119, %s121
    %p125 = scmp.eq.s32.totalorder %s17, 0
    %p126 = por %p124, %p125
    %p127 = scmp.ne.s32.totalorder %s119, %s121
    %p128 = scmp.eq.s32.totalorder %s22, 1
    %p129 = por %p127, %p128
    %p130 = scmp.ne.s32.totalorder %s121, %s122
    %p131 = scmp.eq.s32.totalorder %s22, 0
    %p132 = por %p130, %p131
    %p133 = scmp.ne.s32.totalorder %s121, %s122
    %p134 = scmp.eq.s32.totalorder %s23, 1
    %p135 = por %p133, %p134
    %p137 = scmp.ne.s32.totalorder %s122, %s136
    %p138 = scmp.eq.s32.totalorder %s23, 0
    %p139 = por %p137, %p138
    %s141 = sadd.s32 %s140, 1
    %p144 = scmp.eq.s32.totalorder %s17, 1
    %p145 = scmp.ne.s32.totalorder %s140, %s142
    %p146 = scmp.eq.s32.totalorder %s17, 0
    %p147 = por %p145, %p146
    %p148 = scmp.ne.s32.totalorder %s140, %s142
    %p149 = scmp.eq.s32.totalorder %s22, 1
    %p150 = por %p148, %p149
    %p151 = scmp.ne.s32.totalorder %s142, %s143
    %p152 = scmp.eq.s32.totalorder %s22, 0
    %p153 = por %p151, %p152
    %p154 = scmp.ne.s32.totalorder %s142, %s143
    %p155 = scmp.eq.s32.totalorder %s23, 1
    %p156 = por %p154, %p155
    %p158 = scmp.ne.s32.totalorder %s143, %s157
    %p159 = scmp.eq.s32.totalorder %s23, 0
    %p160 = por %p158, %p159
    %s162 = sadd.s32 %s161, 1
    %p165 = scmp.eq.s32.totalorder %s17, 1
    %p166 = scmp.ne.s32.totalorder %s161, %s163
    %p167 = scmp.eq.s32.totalorder %s17, 0
    %p168 = por %p166, %p167
    %p169 = scmp.ne.s32.totalorder %s161, %s163
    %p170 = scmp.eq.s32.totalorder %s22, 1
    %p171 = por %p169, %p170
    %p172 = scmp.ne.s32.totalorder %s163, %s164
    %p173 = scmp.eq.s32.totalorder %s22, 0
    %p174 = por %p172, %p173
    %p175 = scmp.ne.s32.totalorder %s163, %s164
    %p176 = scmp.eq.s32.totalorder %s23, 1
    %p177 = por %p175, %p176
    %p179 = scmp.ne.s32.totalorder %s164, %s178
    %p180 = scmp.eq.s32.totalorder %s23, 0
    %p181 = por %p179, %p180
    %s183 = sadd.s32 %s182, 1
    %p186 = scmp.eq.s32.totalorder %s17, 1
    %p187 = scmp.ne.s32.totalorder %s182, %s184
    %p188 = scmp.eq.s32.totalorder %s17, 0
    %p189 = por %p187, %p188
    %p190 = scmp.ne.s32.totalorder %s182, %s184
    %p191 = scmp.eq.s32.totalorder %s22, 1
    %p192 = por %p190, %p191
    %p193 = scmp.ne.s32.totalorder %s184, %s185
    %p194 = scmp.eq.s32.totalorder %s22, 0
    %p195 = por %p193, %p194
    %p196 = scmp.ne.s32.totalorder %s184, %s185
    %p197 = scmp.eq.s32.totalorder %s23, 1
    %p198 = por %p196, %p197
    %p200 = scmp.ne.s32.totalorder %s185, %s199
    %p201 = scmp.eq.s32.totalorder %s23, 0
    %p202 = por %p200, %p201
    %s203 = ssub.s32 %s17, %s24
    %p204 = scmp.eq.s32.totalorder %s203, 0
    %s206 = sadd.s32 %s205, 1
    %s207 = scalar_select %p204, %s205, %s206
    %p210 = pneg %p204
    %p211 = scmp.eq.s32.totalorder %s17, 1
    %p212 = por %p210, %p211
    %p213 = scmp.ne.s32.totalorder %s205, %s208
    %p214 = scmp.eq.s32.totalorder %s17, 0
    %p215 = por %p213, %p214
    %p216 = scmp.ne.s32.totalorder %s205, %s208
    %p217 = scmp.eq.s32.totalorder %s22, 1
    %p218 = por %p216, %p217
    %p219 = scmp.ne.s32.totalorder %s208, %s209
    %p220 = scmp.eq.s32.totalorder %s22, 0
    %p221 = por %p219, %p220
    %p222 = scmp.ne.s32.totalorder %s208, %s209
    %p223 = scmp.eq.s32.totalorder %s23, 1
    %p224 = por %p222, %p223
    %p226 = scmp.ne.s32.totalorder %s209, %s225
    %p227 = scmp.eq.s32.totalorder %s23, 0
    %p228 = por %p226, %p227
    %s229 = ssub.s32 %s17, %s24
    %p230 = scmp.eq.s32.totalorder %s229, 0
    %s232 = sadd.s32 %s231, 1
    %s233 = scalar_select %p230, %s231, %s232
    %p236 = pneg %p230
    %p237 = scmp.eq.s32.totalorder %s17, 1
    %p238 = por %p236, %p237
    %p239 = scmp.ne.s32.totalorder %s231, %s234
    %p240 = scmp.eq.s32.totalorder %s17, 0
    %p241 = por %p239, %p240
    %p242 = scmp.ne.s32.totalorder %s231, %s234
    %p243 = scmp.eq.s32.totalorder %s22, 1
    %p244 = por %p242, %p243
    %p245 = scmp.ne.s32.totalorder %s234, %s235
    %p246 = scmp.eq.s32.totalorder %s22, 0
    %p247 = por %p245, %p246
    %p248 = scmp.ne.s32.totalorder %s234, %s235
    %p249 = scmp.eq.s32.totalorder %s23, 1
    %p250 = por %p248, %p249
    %p252 = scmp.ne.s32.totalorder %s235, %s251
    %p253 = scmp.eq.s32.totalorder %s23, 0
    %p254 = por %p252, %p253
    %s255 = ssub.s32 %s17, %s24
    %p256 = scmp.eq.s32.totalorder %s255, 0
    %s258 = sadd.s32 %s257, 1
    %s259 = scalar_select %p256, %s257, %s258
    %p262 = pneg %p256
    %p263 = scmp.eq.s32.totalorder %s17, 1
    %p264 = por %p262, %p263
    %p265 = scmp.ne.s32.totalorder %s257, %s260
    %p266 = scmp.eq.s32.totalorder %s17, 0
    %p267 = por %p265, %p266
    %p268 = scmp.ne.s32.totalorder %s257, %s260
    %p269 = scmp.eq.s32.totalorder %s22, 1
    %p270 = por %p268, %p269
    %p271 = scmp.ne.s32.totalorder %s260, %s261
    %p272 = scmp.eq.s32.totalorder %s22, 0
    %p273 = por %p271, %p272
    %p274 = scmp.ne.s32.totalorder %s260, %s261
    %p275 = scmp.eq.s32.totalorder %s23, 1
    %p276 = por %p274, %p275
    %p278 = scmp.ne.s32.totalorder %s261, %s277
    %p279 = scmp.eq.s32.totalorder %s23, 0
    %p280 = por %p278, %p279
    %p281 = scmp.le.s32.totalorder 1, %s17
    %p282 = scmp.lt.s32.totalorder %s17, 3
    %p283 = pnand %p281, %p282
    %p284 = pneg %p283
    // Predicated region
    $region9: #{improved_edge_gnn_forward.1} parent=5 // pred_check
      _
    $region10: #{improved_edge_gnn_forward.1} parent=5 // pred_check_branch
      %286 = sbr.rel (%p283) target = $region12
    $region11: #{improved_edge_gnn_forward.1} parent=5 // pred_region
      %s287 = ssub.s32 %s17, 1
      // Predicated region
      $region13: #{improved_edge_gnn_forward.1} parent=11 // pred_check
        %p288 = pneg %p90
      $region14: #{improved_edge_gnn_forward.1} parent=11 // pred_check_branch
        %290 = sbr.rel (%p288) target = $region16
      $region15: #{improved_edge_gnn_forward.1} parent=11 // pred_region
        _
      $region16: #{improved_edge_gnn_forward.1} parent=11 // pred_fallthru
        _
      // Predicated region
      $region17: #{improved_edge_gnn_forward.1} parent=11 // pred_check
        %p291 = pneg %p111
      $region18: #{improved_edge_gnn_forward.1} parent=11 // pred_check_branch
        %293 = sbr.rel (%p291) target = $region20
      $region19: #{improved_edge_gnn_forward.1} parent=11 // pred_region
        _
      $region20: #{improved_edge_gnn_forward.1} parent=11 // pred_fallthru
        _
      // Predicated region
      $region21: #{improved_edge_gnn_forward.1} parent=11 // pred_check
        %p294 = pneg %p132
      $region22: #{improved_edge_gnn_forward.1} parent=11 // pred_check_branch
        %296 = sbr.rel (%p294) target = $region24
      $region23: #{improved_edge_gnn_forward.1} parent=11 // pred_region
        _
      $region24: #{improved_edge_gnn_forward.1} parent=11 // pred_fallthru
        _
      // Predicated region
      $region25: #{improved_edge_gnn_forward.1} parent=11 // pred_check
        %p297 = pneg %p153
      $region26: #{improved_edge_gnn_forward.1} parent=11 // pred_check_branch
        %299 = sbr.rel (%p297) target = $region28
      $region27: #{improved_edge_gnn_forward.1} parent=11 // pred_region
        _
      $region28: #{improved_edge_gnn_forward.1} parent=11 // pred_fallthru
        _
      // Predicated region
      $region29: #{improved_edge_gnn_forward.1} parent=11 // pred_check
        %p300 = pneg %p174
      $region30: #{improved_edge_gnn_forward.1} parent=11 // pred_check_branch
        %302 = sbr.rel (%p300) target = $region32
      $region31: #{improved_edge_gnn_forward.1} parent=11 // pred_region
        _
      $region32: #{improved_edge_gnn_forward.1} parent=11 // pred_fallthru
        _
      // Predicated region
      $region33: #{improved_edge_gnn_forward.1} parent=11 // pred_check
        %p303 = pneg %p195
      $region34: #{improved_edge_gnn_forward.1} parent=11 // pred_check_branch
        %305 = sbr.rel (%p303) target = $region36
      $region35: #{improved_edge_gnn_forward.1} parent=11 // pred_region
        _
      $region36: #{improved_edge_gnn_forward.1} parent=11 // pred_fallthru
        _
    $region12: #{improved_edge_gnn_forward.1} parent=5 // pred_fallthru
      _
    %p306 = scmp.lt.s32.totalorder %s17, 2
    // Predicated region
    $region37: #{improved_edge_gnn_forward.1} parent=5 // pred_check
      %p307 = pneg %p306
    $region38: #{improved_edge_gnn_forward.1} parent=5 // pred_check_branch
      %309 = sbr.rel (%p307) target = $region40
    $region39: #{improved_edge_gnn_forward.1} parent=5 // pred_region
      // Predicated region
      $region41: #{improved_edge_gnn_forward.1} parent=39 // pred_check
        %p310 = pneg %p37
      $region42: #{improved_edge_gnn_forward.1} parent=39 // pred_check_branch
        %312 = sbr.rel (%p310) target = $region44
      $region43: #{improved_edge_gnn_forward.1} parent=39 // pred_region
        %s313 = smul.u32 16, %s17
        %p314 = scmp.lt.s32.totalorder %s313, 31
        %s315 = scalar_select %p314, %s313, 31
        %s316 = smul.addr %s315, 8
        %s317 = scalar_lea.vmem %s0, %s316
        %s318 = smul.u32 16, %s17
      $region44: #{improved_edge_gnn_forward.1} parent=39 // pred_fallthru
        _
      // Predicated region
      $region45: #{improved_edge_gnn_forward.1} parent=39 // pred_check
        %p319 = pneg %p63
      $region46: #{improved_edge_gnn_forward.1} parent=39 // pred_check_branch
        %321 = sbr.rel (%p319) target = $region48
      $region47: #{improved_edge_gnn_forward.1} parent=39 // pred_region
        %s322 = smul.u32 16, %s17
        %p323 = scmp.lt.s32.totalorder %s322, 31
        %s324 = scalar_select %p323, %s322, 31
        %s325 = smul.addr %s324, 8
        %s326 = scalar_lea.vmem %s1, %s325
        %s327 = smul.u32 16, %s17
      $region48: #{improved_edge_gnn_forward.1} parent=39 // pred_fallthru
        _
    $region40: #{improved_edge_gnn_forward.1} parent=5 // pred_fallthru
      _
    %p328 = scmp.le.s32.totalorder 1, %s17
    %p329 = scmp.lt.s32.totalorder %s17, 3
    %p330 = pnand %p328, %p329
    %p331 = pneg %p330
    // Predicated region
    $region49: #{improved_edge_gnn_forward.1} parent=5 // pred_check
      _
    $region50: #{improved_edge_gnn_forward.1} parent=5 // pred_check_branch
      %333 = sbr.rel (%p330) target = $region52
    $region51: #{improved_edge_gnn_forward.1} parent=5 // pred_region
      %s334 = ssub.s32 %s17, 1
      %s335 = smul.u32 16, %s22
      %p336 = scmp.lt.s32.totalorder %s335, 31
      %s337 = scalar_select %p336, %s335, 31
      %s338 = smul.addr %s337, 8
      %s339 = scalar_lea.vmem %s0, %s338
      %p340 = pneg %p43
      %p341 = pneg %p40
      %s342 = smul.u32 16, %s22
      %p343 = scmp.lt.s32.totalorder %s342, 31
      %s344 = scalar_select %p343, %s342, 31
      %s345 = smul.addr %s344, 8
      %s346 = scalar_lea.vmem %s1, %s345
      %p347 = pneg %p69
      %p348 = pneg %p66
      %p349 = pneg %p90
      %p350 = pneg %p87
      %p351 = pneg %p111
      %p352 = pneg %p108
      %p353 = pneg %p132
      %p354 = pneg %p129
      %p355 = pneg %p153
      %p356 = pneg %p150
      %p357 = pneg %p174
      %p358 = pneg %p171
      %p359 = pneg %p195
      %p360 = pneg %p192
      %p361 = pneg %p221
      %p362 = pneg %p218
      %s363 = smul.u32 2, %s22
      %p364 = scmp.lt.s32.totalorder %s363, 3
      %s365 = scalar_select %p364, %s363, 3
      %s366 = smul.addr %s365, 8
      %s367 = scalar_lea.vmem %s8, %s366
      %p368 = pneg %p247
      %p369 = pneg %p244
      %s370 = smul.u32 16, %s22
      %p371 = scmp.lt.s32.totalorder %s370, 31
      %s372 = scalar_select %p371, %s370, 31
      %s373 = smul.addr %s372, 8
      %s374 = scalar_lea.vmem %s9, %s373
      %p375 = pneg %p273
      %p376 = pneg %p270
      %p377 = scmp.lt.s32.totalorder %s22, 1
      %s378 = scalar_select %p377, %s22, 1
      %s379 = scalar_lea.vmem %s10, %s378
      %s380 = smul.u32 16, %s22
      %p381 = scmp.lt.s32.totalorder %s380, 31
      %s382 = scalar_select %p381, %s380, 31
      %s383 = smul.addr %s382, 8
      %s384 = scalar_lea.vmem %s0, %s383
      %s385 = smul.u32 16, %s22
      %s386 = smul.u32 16, %s22
      %p387 = scmp.lt.s32.totalorder %s386, 31
      %s388 = scalar_select %p387, %s386, 31
      %s389 = smul.addr %s388, 8
      %s390 = scalar_lea.vmem %s1, %s389
      %s391 = smul.u32 16, %s22
      %s392 = smul.u32 2, %s22
      %p393 = scmp.lt.s32.totalorder %s392, 3
      %s394 = scalar_select %p393, %s392, 3
      %s395 = smul.addr %s394, 8
      %s396 = scalar_lea.vmem %s8, %s395
      %s397 = smul.u32 2, %s22
      %s398 = smul.u32 16, %s22
      %p399 = scmp.lt.s32.totalorder %s398, 31
      %s400 = scalar_select %p399, %s398, 31
      %s401 = smul.addr %s400, 8
      %s402 = scalar_lea.vmem %s9, %s401
      %s403 = smul.u32 16, %s22
      %p404 = scmp.lt.s32.totalorder %s22, 1
      %s405 = scalar_select %p404, %s22, 1
      %s406 = scalar_lea.vmem %s10, %s405
      %v408 = vld [vmem:[%s384] sm:$0xff]
      %v409 = vld [vmem:[%s384 + $0x8] sm:$0xff]
      %v410 = vld [vmem:[%s384 + $0x10] sm:$0xff]
      %v411 = vld [vmem:[%s384 + $0x18] sm:$0xff]
      %v412 = vld [vmem:[%s384 + $0x20] sm:$0xff]
      %v413 = vld [vmem:[%s384 + $0x28] sm:$0xff]
      %v414 = vld [vmem:[%s384 + $0x30] sm:$0xff]
      %v415 = vld [vmem:[%s384 + $0x38] sm:$0xff]
      %v416 = vld [vmem:[%s384 + $0x40] sm:$0xff]
      %v417 = vld [vmem:[%s384 + $0x48] sm:$0xff]
      %v418 = vld [vmem:[%s384 + $0x50] sm:$0xff]
      %v419 = vld [vmem:[%s384 + $0x58] sm:$0xff]
      %v420 = vld [vmem:[%s384 + $0x60] sm:$0xff]
      %v421 = vld [vmem:[%s384 + $0x68] sm:$0xff]
      %v422 = vld [vmem:[%s384 + $0x70] sm:$0xff]
      %v423 = vld [vmem:[%s384 + $0x78] sm:$0xff]
      %v424 = vld [vmem:[%s390] sm:$0xff]
      %v425 = vld [vmem:[%s390 + $0x8] sm:$0xff]
      %v426 = vld [vmem:[%s390 + $0x10] sm:$0xff]
      %v427 = vld [vmem:[%s390 + $0x18] sm:$0xff]
      %v428 = vld [vmem:[%s390 + $0x20] sm:$0xff]
      %v429 = vld [vmem:[%s390 + $0x28] sm:$0xff]
      %v430 = vld [vmem:[%s390 + $0x30] sm:$0xff]
      %v431 = vld [vmem:[%s390 + $0x38] sm:$0xff]
      %v432 = vld [vmem:[%s390 + $0x40] sm:$0xff]
      %v433 = vld [vmem:[%s390 + $0x48] sm:$0xff]
      %v434 = vld [vmem:[%s390 + $0x50] sm:$0xff]
      %v435 = vld [vmem:[%s390 + $0x58] sm:$0xff]
      %v436 = vld [vmem:[%s390 + $0x60] sm:$0xff]
      %v437 = vld [vmem:[%s390 + $0x68] sm:$0xff]
      %v438 = vld [vmem:[%s390 + $0x70] sm:$0xff]
      %v439 = vld [vmem:[%s390 + $0x78] sm:$0xff]
      %v440 = vld [vmem:[%s7] sm:$0x1]
      %v441 = vld [vmem:[%s7 + $0x1] sm:$0x1]
      %v442 = vld [vmem:[%s7 + $0x2] sm:$0x1]
      %v443 = vld [vmem:[%s7 + $0x3] sm:$0x1]
      %v444 = vld [vmem:[%s7 + $0x4] sm:$0x1]
      %v445 = vld [vmem:[%s7 + $0x5] sm:$0x1]
      %v446 = vld [vmem:[%s7 + $0x6] sm:$0x1]
      %v447 = vmul.f32 %v408, %v408
      %v448 = vmul.f32 %v409, %v409
      %v449 = vmul.f32 %v410, %v410
      %v450 = vmul.f32 %v411, %v411
      %v451 = vmul.f32 %v412, %v412
      %v452 = vmul.f32 %v413, %v413
      %v453 = vmul.f32 %v414, %v414
      %v454 = vmul.f32 %v415, %v415
      %v455 = vmul.f32 %v416, %v416
      %v456 = vmul.f32 %v417, %v417
      %v457 = vmul.f32 %v418, %v418
      %v458 = vmul.f32 %v419, %v419
      %v459 = vmul.f32 %v420, %v420
      %v460 = vmul.f32 %v421, %v421
      %v461 = vmul.f32 %v422, %v422
      %v462 = vmul.f32 %v423, %v423
      %vm463 = vcmask 130048
      %v464 = vsel %vm463, %v447, 0.0
      %465 = vadd.xlane.f32.xlu0 %v464
      %v466 = vpop.xlane.xlu0 %465
      %v467 = vsel %vm463, %v448, 0.0
      %468 = vadd.xlane.f32.xlu0 %v467
      %v469 = vpop.xlane.xlu0 %468
      %v470 = vsel %vm463, %v449, 0.0
      %471 = vadd.xlane.f32.xlu0 %v470
      %v472 = vpop.xlane.xlu0 %471
      %v473 = vsel %vm463, %v450, 0.0
      %474 = vadd.xlane.f32.xlu0 %v473
      %v475 = vpop.xlane.xlu0 %474
      %v476 = vsel %vm463, %v451, 0.0
      %477 = vadd.xlane.f32.xlu0 %v476
      %v478 = vpop.xlane.xlu0 %477
      %v479 = vsel %vm463, %v452, 0.0
      %480 = vadd.xlane.f32.xlu0 %v479
      %v481 = vpop.xlane.xlu0 %480
      %v482 = vsel %vm463, %v453, 0.0
      %483 = vadd.xlane.f32.xlu0 %v482
      %v484 = vpop.xlane.xlu0 %483
      %v485 = vsel %vm463, %v454, 0.0
      %486 = vadd.xlane.f32.xlu0 %v485
      %v487 = vpop.xlane.xlu0 %486
      %v488 = vsel %vm463, %v455, 0.0
      %489 = vadd.xlane.f32.xlu0 %v488
      %v490 = vpop.xlane.xlu0 %489
      %v491 = vsel %vm463, %v456, 0.0
      %492 = vadd.xlane.f32.xlu0 %v491
      %v493 = vpop.xlane.xlu0 %492
      %v494 = vsel %vm463, %v457, 0.0
      %495 = vadd.xlane.f32.xlu0 %v494
      %v496 = vpop.xlane.xlu0 %495
      %v497 = vsel %vm463, %v458, 0.0
      %498 = vadd.xlane.f32.xlu0 %v497
      %v499 = vpop.xlane.xlu0 %498
      %v500 = vsel %vm463, %v459, 0.0
      %501 = vadd.xlane.f32.xlu0 %v500
      %v502 = vpop.xlane.xlu0 %501
      %v503 = vsel %vm463, %v460, 0.0
      %504 = vadd.xlane.f32.xlu0 %v503
      %v505 = vpop.xlane.xlu0 %504
      %v506 = vsel %vm463, %v461, 0.0
      %507 = vadd.xlane.f32.xlu0 %v506
      %v508 = vpop.xlane.xlu0 %507
      %v509 = vsel %vm463, %v462, 0.0
      %510 = vadd.xlane.f32.xlu0 %v509
      %v511 = vpop.xlane.xlu0 %510
      %v512 = vmax.f32 %v466, 1e-24
      %v513 = vmax.f32 %v469, 1e-24
      %v514 = vmax.f32 %v472, 1e-24
      %v515 = vmax.f32 %v475, 1e-24
      %v516 = vmax.f32 %v478, 1e-24
      %v517 = vmax.f32 %v481, 1e-24
      %v518 = vmax.f32 %v484, 1e-24
      %v519 = vmax.f32 %v487, 1e-24
      %v520 = vmax.f32 %v490, 1e-24
      %v521 = vmax.f32 %v493, 1e-24
      %v522 = vmax.f32 %v496, 1e-24
      %v523 = vmax.f32 %v499, 1e-24
      %v524 = vmax.f32 %v502, 1e-24
      %v525 = vmax.f32 %v505, 1e-24
      %v526 = vmax.f32 %v508, 1e-24
      %v527 = vmax.f32 %v511, 1e-24
      %v528 = vrsqrt.pop %v512
      %v529 = vrsqrt.pop %v513
      %v530 = vrsqrt.pop %v514
      %v531 = vrsqrt.pop %v515
      %v532 = vrsqrt.pop %v516
      %v533 = vrsqrt.pop %v517
      %v534 = vrsqrt.pop %v518
      %v535 = vrsqrt.pop %v519
      %v536 = vrsqrt.pop %v520
      %v537 = vrsqrt.pop %v521
      %v538 = vrsqrt.pop %v522
      %v539 = vrsqrt.pop %v523
      %v540 = vrsqrt.pop %v524
      %v541 = vrsqrt.pop %v525
      %v542 = vrsqrt.pop %v526
      %v543 = vrsqrt.pop %v527
      %v544 = vmul.f32 %v408, %v528
      %v545 = vmul.f32 %v409, %v529
      %v546 = vmul.f32 %v410, %v530
      %v547 = vmul.f32 %v411, %v531
      %v548 = vmul.f32 %v412, %v532
      %v549 = vmul.f32 %v413, %v533
      %v550 = vmul.f32 %v414, %v534
      %v551 = vmul.f32 %v415, %v535
      %v552 = vmul.f32 %v416, %v536
      %v553 = vmul.f32 %v417, %v537
      %v554 = vmul.f32 %v418, %v538
      %v555 = vmul.f32 %v419, %v539
      %v556 = vmul.f32 %v420, %v540
      %v557 = vmul.f32 %v421, %v541
      %v558 = vmul.f32 %v422, %v542
      %v559 = vmul.f32 %v423, %v543
      %v560 = vld [vmem:[%s2] sm:$0xf]
      %v561 = vld [vmem:[%s2 + $0x4] sm:$0xf]
      %v562 = vpack.c.bf16 %v545, %v544
      %v563 = vpack.c.bf16 %v547, %v546
      %v564 = vpack.c.bf16 %v549, %v548
      %v565 = vpack.c.bf16 %v551, %v550
      %v566 = vpack.c.bf16 %v553, %v552
      %v567 = vpack.c.bf16 %v555, %v554
      %v568 = vpack.c.bf16 %v557, %v556
      %v569 = vpack.c.bf16 %v559, %v558
      %v570 = vlaneseq
      %v571 = vshrl.u32 %v570, 7
      %v572 = vsub.s32 0, %v571
      %v573 = vrot.slane %v440, %v572
      %v576 = vunpack.c.l.b16 %v560
      %v577 = vunpack.c.l.b16 %v561
      %v578 = vpack.c.b16 %v577, %v576
      %v581 = vsel %vm463, %v562, 0
      %v584 = vsel %vm463, %v563, 0
      %v587 = vsel %vm463, %v564, 0
      %v590 = vsel %vm463, %v565, 0
      %v593 = vsel %vm463, %v566, 0
      %v596 = vsel %vm463, %v567, 0
      %v599 = vsel %vm463, %v568, 0
      %v602 = vsel %vm463, %v569, 0
      %604 = vmatprep.subr.bf16.mxu0 0
      %605 = vmatpush1.bf16.msra.mxu0 %v578
      %606 = vmatprep.subr.bf16.mxu0 0
      %607 = vmatpush1.bf16.msra.mxu0 0
      %608 = vmatprep.subr.bf16.mxu0 0
      %609 = vmatpush1.bf16.msra.mxu0 0
      %610 = vmatprep.subr.bf16.mxu0 0
      %611 = vmatpush1.bf16.msra.mxu0 0
      %612 = vmatprep.subr.bf16.mxu0 0
      %613 = vmatpush1.bf16.msra.mxu0 0
      %614 = vmatprep.subr.bf16.mxu0 0
      %615 = vmatpush1.bf16.msra.mxu0 0
      %616 = vmatprep.subr.bf16.mxu0 0
      %617 = vmatpush1.bf16.msra.mxu0 0
      %618 = vmatprep.subr.bf16.mxu0 0
      %619 = vmatpush1.bf16.msra.mxu0 0
      %620 = vmatprep.subr.bf16.mxu0 0
      %621 = vmatpush1.bf16.msra.mxu0 0
      %622 = vmatprep.subr.bf16.mxu0 0
      %623 = vmatpush1.bf16.msra.mxu0 0
      %624 = vmatprep.subr.bf16.mxu0 0
      %625 = vmatpush1.bf16.msra.mxu0 0
      %626 = vmatprep.subr.bf16.mxu0 0
      %627 = vmatpush1.bf16.msra.mxu0 0
      %628 = vmatprep.subr.bf16.mxu0 0
      %629 = vmatpush1.bf16.msra.mxu0 0
      %630 = vmatprep.subr.bf16.mxu0 0
      %631 = vmatpush1.bf16.msra.mxu0 0
      %632 = vmatprep.subr.bf16.mxu0 0
      %633 = vmatpush1.bf16.msra.mxu0 0
      %634 = vmatprep.subr.bf16.mxu0 0
      %635 = vmatpush1.bf16.msra.mxu0 0
      %636 = vmatprep.mubr.bf16.mxu0 0
      %637 = vmatmul.mubr.bf16.gmra.mrb[0].mxu0 %v581
      %v638 = vpop.f32.mrb[0].mxu0
      %v639 = vadd.f32 %v573, %v638
      %v640 = vpop.f32.mrb[0].mxu0
      %v641 = vpop.f32.mrb[0].mxu0
      %v642 = vadd.f32 %v573, %v641
      %v643 = vpop.f32.mrb[0].mxu0
      %644 = vmatprep.mubr.bf16.mxu0 0
      %645 = vmatmul.mubr.bf16.gmra.mrb[0].mxu0 %v584
      %v646 = vpop.f32.mrb[0].mxu0
      %v647 = vadd.f32 %v573, %v646
      %v648 = vpop.f32.mrb[0].mxu0
      %v649 = vpop.f32.mrb[0].mxu0
      %v650 = vadd.f32 %v573, %v649
      %v651 = vpop.f32.mrb[0].mxu0
      %652 = vmatprep.mubr.bf16.mxu0 0
      %653 = vmatmul.mubr.bf16.gmra.mrb[0].mxu0 %v587
      %v654 = vpop.f32.mrb[0].mxu0
      %v655 = vadd.f32 %v573, %v654
      %v656 = vpop.f32.mrb[0].mxu0
      %v657 = vpop.f32.mrb[0].mxu0
      %v658 = vadd.f32 %v573, %v657
      %v659 = vpop.f32.mrb[0].mxu0
      %660 = vmatprep.mubr.bf16.mxu0 0
      %661 = vmatmul.mubr.bf16.gmra.mrb[0].mxu0 %v590
      %v662 = vpop.f32.mrb[0].mxu0
      %v663 = vadd.f32 %v573, %v662
      %v664 = vpop.f32.mrb[0].mxu0
      %v665 = vpop.f32.mrb[0].mxu0
      %v666 = vadd.f32 %v573, %v665
      %v667 = vpop.f32.mrb[0].mxu0
      %668 = vmatprep.mubr.bf16.mxu0 0
      %669 = vmatmul.mubr.bf16.gmra.mrb[0].mxu0 %v593
      %v670 = vpop.f32.mrb[0].mxu0
      %v671 = vadd.f32 %v573, %v670
      %v672 = vpop.f32.mrb[0].mxu0
      %v673 = vpop.f32.mrb[0].mxu0
      %v674 = vadd.f32 %v573, %v673
      %v675 = vpop.f32.mrb[0].mxu0
      %676 = vmatprep.mubr.bf16.mxu0 0
      %677 = vmatmul.mubr.bf16.gmra.mrb[0].mxu0 %v596
      %v678 = vpop.f32.mrb[0].mxu0
      %v679 = vadd.f32 %v573, %v678
      %v680 = vpop.f32.mrb[0].mxu0
      %v681 = vpop.f32.mrb[0].mxu0
      %v682 = vadd.f32 %v573, %v681
      %v683 = vpop.f32.mrb[0].mxu0
      %684 = vmatprep.mubr.bf16.mxu0 0
      %685 = vmatmul.mubr.bf16.gmra.mrb[0].mxu0 %v599
      %v686 = vpop.f32.mrb[0].mxu0
      %v687 = vadd.f32 %v573, %v686
      %v688 = vpop.f32.mrb[0].mxu0
      %v689 = vpop.f32.mrb[0].mxu0
      %v690 = vadd.f32 %v573, %v689
      %v691 = vpop.f32.mrb[0].mxu0
      %692 = vmatprep.mubr.bf16.mxu0 0
      %693 = vmatmul.mubr.bf16.gmra.mrb[0].mxu0 %v602
      %v694 = vpop.f32.mrb[0].mxu0
      %v695 = vadd.f32 %v573, %v694
      %v696 = vpop.f32.mrb[0].mxu0
      %v697 = vpop.f32.mrb[0].mxu0
      %v698 = vadd.f32 %v573, %v697
      %v699 = vpop.f32.mrb[0].mxu0
      %700 = vdwg.mxu0
      %v701 = vmax.f32 %v639, 0.0
      %v702 = vmax.f32 %v642, 0.0
      %v703 = vmax.f32 %v647, 0.0
      %v704 = vmax.f32 %v650, 0.0
      %v705 = vmax.f32 %v655, 0.0
      %v706 = vmax.f32 %v658, 0.0
      %v707 = vmax.f32 %v663, 0.0
      %v708 = vmax.f32 %v666, 0.0
      %v709 = vmax.f32 %v671, 0.0
      %v710 = vmax.f32 %v674, 0.0
      %v711 = vmax.f32 %v679, 0.0
      %v712 = vmax.f32 %v682, 0.0
      %v713 = vmax.f32 %v687, 0.0
      %v714 = vmax.f32 %v690, 0.0
      %v715 = vmax.f32 %v695, 0.0
      %v716 = vmax.f32 %v698, 0.0
      %v717 = vld [vmem:[%s3] sm:$0xf]
      %v718 = vld [vmem:[%s3 + $0x4] sm:$0xf]
      %v719 = vld [vmem:[%s3 + $0x8] sm:$0xf]
      %v720 = vld [vmem:[%s3 + $0xc] sm:$0xf]
      %v721 = vpack.c.bf16 %v702, %v701
      %v722 = vpack.c.bf16 %v704, %v703
      %v723 = vpack.c.bf16 %v706, %v705
      %v724 = vpack.c.bf16 %v708, %v707
      %v725 = vpack.c.bf16 %v710, %v709
      %v726 = vpack.c.bf16 %v712, %v711
      %v727 = vpack.c.bf16 %v714, %v713
      %v728 = vpack.c.bf16 %v716, %v715
      %v729 = vlaneseq
      %v730 = vshrl.u32 %v729, 7
      %v731 = vsub.s32 0, %v730
      %v732 = vrot.slane %v441, %v731
      %v737 = vunpack.c.l.b16 %v717
      %v738 = vunpack.c.l.b16 %v718
      %v739 = vunpack.c.l.b16 %v719
      %v740 = vunpack.c.l.b16 %v720
      %v741 = vpack.c.b16 %v738, %v737
      %v742 = vpack.c.b16 %v740, %v739
      %vm745 = vcmask 261120
      %v747 = vsel %vm745, %v721, 0
      %v750 = vsel %vm745, %v722, 0
      %v753 = vsel %vm745, %v723, 0
      %v756 = vsel %vm745, %v724, 0
      %v759 = vsel %vm745, %v725, 0
      %v762 = vsel %vm745, %v726, 0
      %v765 = vsel %vm745, %v727, 0
      %v768 = vsel %vm745, %v728, 0
      %770 = vmatprep.subr.bf16.mxu0 0
      %771 = vmatpush1.bf16.msra.mxu0 %v741
      %772 = vmatprep.subr.bf16.mxu0 0
      %773 = vmatpush1.bf16.msra.mxu0 %v742
      %774 = vmatprep.subr.bf16.mxu0 0
      %775 = vmatpush1.bf16.msra.mxu0 0
      %776 = vmatprep.subr.bf16.mxu0 0
      %777 = vmatpush1.bf16.msra.mxu0 0
      %778 = vmatprep.subr.bf16.mxu0 0
      %779 = vmatpush1.bf16.msra.mxu0 0
      %780 = vmatprep.subr.bf16.mxu0 0
      %781 = vmatpush1.bf16.msra.mxu0 0
      %782 = vmatprep.subr.bf16.mxu0 0
      %783 = vmatpush1.bf16.msra.mxu0 0
      %784 = vmatprep.subr.bf16.mxu0 0
      %785 = vmatpush1.bf16.msra.mxu0 0
      %786 = vmatprep.subr.bf16.mxu0 0
      %787 = vmatpush1.bf16.msra.mxu0 0
      %788 = vmatprep.subr.bf16.mxu0 0
      %789 = vmatpush1.bf16.msra.mxu0 0
      %790 = vmatprep.subr.bf16.mxu0 0
      %791 = vmatpush1.bf16.msra.mxu0 0
      %792 = vmatprep.subr.bf16.mxu0 0
      %793 = vmatpush1.bf16.msra.mxu0 0
      %794 = vmatprep.subr.bf16.mxu0 0
      %795 = vmatpush1.bf16.msra.mxu0 0
      %796 = vmatprep.subr.bf16.mxu0 0
      %797 = vmatpush1.bf16.msra.mxu0 0
      %798 = vmatprep.subr.bf16.mxu0 0
      %799 = vmatpush1.bf16.msra.mxu0 0
      %800 = vmatprep.subr.bf16.mxu0 0
      %801 = vmatpush1.bf16.msra.mxu0 0
      %802 = vmatprep.mubr.bf16.mxu0 0
      %803 = vmatmul.mubr.bf16.gmra.mrb[0].mxu0 %v747
      %v804 = vpop.f32.mrb[0].mxu0
      %v805 = vadd.f32 %v732, %v804
      %v806 = vpop.f32.mrb[0].mxu0
      %v807 = vpop.f32.mrb[0].mxu0
      %v808 = vadd.f32 %v732, %v807
      %v809 = vpop.f32.mrb[0].mxu0
      %810 = vmatprep.mubr.bf16.mxu0 0
      %811 = vmatmul.mubr.bf16.gmra.mrb[0].mxu0 %v750
      %v812 = vpop.f32.mrb[0].mxu0
      %v813 = vadd.f32 %v732, %v812
      %v814 = vpop.f32.mrb[0].mxu0
      %v815 = vpop.f32.mrb[0].mxu0
      %v816 = vadd.f32 %v732, %v815
      %v817 = vpop.f32.mrb[0].mxu0
      %818 = vmatprep.mubr.bf16.mxu0 0
      %819 = vmatmul.mubr.bf16.gmra.mrb[0].mxu0 %v753
      %v820 = vpop.f32.mrb[0].mxu0
      %v821 = vadd.f32 %v732, %v820
      %v822 = vpop.f32.mrb[0].mxu0
      %v823 = vpop.f32.mrb[0].mxu0
      %v824 = vadd.f32 %v732, %v823
      %v825 = vpop.f32.mrb[0].mxu0
      %826 = vmatprep.mubr.bf16.mxu0 0
      %827 = vmatmul.mubr.bf16.gmra.mrb[0].mxu0 %v756
      %v828 = vpop.f32.mrb[0].mxu0
      %v829 = vadd.f32 %v732, %v828
      %v830 = vpop.f32.mrb[0].mxu0
      %v831 = vpop.f32.mrb[0].mxu0
      %v832 = vadd.f32 %v732, %v831
      %v833 = vpop.f32.mrb[0].mxu0
      %834 = vmatprep.mubr.bf16.mxu0 0
      %835 = vmatmul.mubr.bf16.gmra.mrb[0].mxu0 %v759
      %v836 = vpop.f32.mrb[0].mxu0
      %v837 = vadd.f32 %v732, %v836
      %v838 = vpop.f32.mrb[0].mxu0
      %v839 = vpop.f32.mrb[0].mxu0
      %v840 = vadd.f32 %v732, %v839
      %v841 = vpop.f32.mrb[0].mxu0
      %842 = vmatprep.mubr.bf16.mxu0 0
      %843 = vmatmul.mubr.bf16.gmra.mrb[0].mxu0 %v762
      %v844 = vpop.f32.mrb[0].mxu0
      %v845 = vadd.f32 %v732, %v844
      %v846 = vpop.f32.mrb[0].mxu0
      %v847 = vpop.f32.mrb[0].mxu0
      %v848 = vadd.f32 %v732, %v847
      %v849 = vpop.f32.mrb[0].mxu0
      %850 = vmatprep.mubr.bf16.mxu0 0
      %851 = vmatmul.mubr.bf16.gmra.mrb[0].mxu0 %v765
      %v852 = vpop.f32.mrb[0].mxu0
      %v853 = vadd.f32 %v732, %v852
      %v854 = vpop.f32.mrb[0].mxu0
      %v855 = vpop.f32.mrb[0].mxu0
      %v856 = vadd.f32 %v732, %v855
      %v857 = vpop.f32.mrb[0].mxu0
      %858 = vmatprep.mubr.bf16.mxu0 0
      %859 = vmatmul.mubr.bf16.gmra.mrb[0].mxu0 %v768
      %v860 = vpop.f32.mrb[0].mxu0
      %v861 = vadd.f32 %v732, %v860
      %v862 = vpop.f32.mrb[0].mxu0
      %v863 = vpop.f32.mrb[0].mxu0
      %v864 = vadd.f32 %v732, %v863
      %v865 = vpop.f32.mrb[0].mxu0
      %866 = vdwg.mxu0
      %v867 = vmax.f32 %v805, 0.0
      %v868 = vmax.f32 %v808, 0.0
      %v869 = vmax.f32 %v813, 0.0
      %v870 = vmax.f32 %v816, 0.0
      %v871 = vmax.f32 %v821, 0.0
      %v872 = vmax.f32 %v824, 0.0
      %v873 = vmax.f32 %v829, 0.0
      %v874 = vmax.f32 %v832, 0.0
      %v875 = vmax.f32 %v837, 0.0
      %v876 = vmax.f32 %v840, 0.0
      %v877 = vmax.f32 %v845, 0.0
      %v878 = vmax.f32 %v848, 0.0
      %v879 = vmax.f32 %v853, 0.0
      %v880 = vmax.f32 %v856, 0.0
      %v881 = vmax.f32 %v861, 0.0
      %v882 = vmax.f32 %v864, 0.0
      %v883 = vpack.c.bf16 %v868, %v867
      %v884 = vpack.c.bf16 %v870, %v869
      %v885 = vpack.c.bf16 %v872, %v871
      %v886 = vpack.c.bf16 %v874, %v873
      %v887 = vpack.c.bf16 %v876, %v875
      %v888 = vpack.c.bf16 %v878, %v877
      %v889 = vpack.c.bf16 %v880, %v879
      %v890 = vpack.c.bf16 %v882, %v881
      %v892 = vsel %vm745, %v883, 0
      %v895 = vsel %vm745, %v884, 0
      %v898 = vsel %vm745, %v885, 0
      %v901 = vsel %vm745, %v886, 0
      %v904 = vsel %vm745, %v887, 0
      %v907 = vsel %vm745, %v888, 0
      %v910 = vsel %vm745, %v889, 0
      %v913 = vsel %vm745, %v890, 0
      %915 = vmatprep.subr.bf16.mxu0 0
      %916 = vmatpush1.bf16.xpose.msra.mxu0 %v892
      %917 = vmatprep.subr.bf16.mxu0 0
      %918 = vmatpush1.bf16.xpose.msra.mxu0 %v895
      %919 = vmatprep.subr.bf16.mxu0 0
      %920 = vmatpush1.bf16.xpose.msra.mxu0 %v898
      %921 = vmatprep.subr.bf16.mxu0 0
      %922 = vmatpush1.bf16.xpose.msra.mxu0 %v901
      %923 = vmatprep.subr.bf16.mxu0 0
      %924 = vmatpush1.bf16.xpose.msra.mxu0 %v904
      %925 = vmatprep.subr.bf16.mxu0 0
      %926 = vmatpush1.bf16.xpose.msra.mxu0 %v907
      %927 = vmatprep.subr.bf16.mxu0 0
      %928 = vmatpush1.bf16.xpose.msra.mxu0 %v910
      %929 = vmatprep.subr.bf16.mxu0 0
      %930 = vmatpush1.bf16.xpose.msra.mxu0 %v913
      %931 = vmatprep.subr.bf16.mxu0 0
      %932 = vmatpush1.bf16.xpose.msra.mxu0 0
      %933 = vmatprep.subr.bf16.mxu0 0
      %934 = vmatpush1.bf16.xpose.msra.mxu0 0
      %935 = vmatprep.subr.bf16.mxu0 0
      %936 = vmatpush1.bf16.xpose.msra.mxu0 0
      %937 = vmatprep.subr.bf16.mxu0 0
      %938 = vmatpush1.bf16.xpose.msra.mxu0 0
      %939 = vmatprep.subr.bf16.mxu0 0
      %940 = vmatpush1.bf16.xpose.msra.mxu0 0
      %941 = vmatprep.subr.bf16.mxu0 0
      %942 = vmatpush1.bf16.xpose.msra.mxu0 0
      %943 = vmatprep.subr.bf16.mxu0 0
      %944 = vmatpush1.bf16.xpose.msra.mxu0 0
      %945 = vmatprep.subr.bf16.mxu0 0
      %946 = vmatpush1.bf16.xpose.msra.mxu0 0
      %947 = vmatprep.mubr.bf16.mxu0 0
      %948 = vmatmul.mubr.bf16.gmra.mrb[0].mxu0 %v892
      %v949 = vpop.f32.mrb[0].mxu0
      %v950 = vadd.f32 0.0, %v949
      %v951 = vpop.f32.mrb[0].mxu0
      %v952 = vpop.f32.mrb[0].mxu0
      %v953 = vadd.f32 0.0, %v952
      %v954 = vpop.f32.mrb[0].mxu0
      %955 = vmatprep.mubr.bf16.mxu0 0
      %956 = vmatmul.mubr.bf16.gmra.mrb[0].mxu0 %v895
      %v957 = vpop.f32.mrb[0].mxu0
      %v958 = vadd.f32 0.0, %v957
      %v959 = vpop.f32.mrb[0].mxu0
      %v960 = vpop.f32.mrb[0].mxu0
      %v961 = vadd.f32 0.0, %v960
      %v962 = vpop.f32.mrb[0].mxu0
      %963 = vmatprep.mubr.bf16.mxu0 0
      %964 = vmatmul.mubr.bf16.gmra.mrb[0].mxu0 %v898
      %v965 = vpop.f32.mrb[0].mxu0
      %v966 = vadd.f32 0.0, %v965
      %v967 = vpop.f32.mrb[0].mxu0
      %v968 = vpop.f32.mrb[0].mxu0
      %v969 = vadd.f32 0.0, %v968
      %v970 = vpop.f32.mrb[0].mxu0
      %971 = vmatprep.mubr.bf16.mxu0 0
      %972 = vmatmul.mubr.bf16.gmra.mrb[0].mxu0 %v901
      %v973 = vpop.f32.mrb[0].mxu0
      %v974 = vadd.f32 0.0, %v973
      %v975 = vpop.f32.mrb[0].mxu0
      %v976 = vpop.f32.mrb[0].mxu0
      %v977 = vadd.f32 0.0, %v976
      %v978 = vpop.f32.mrb[0].mxu0
      %979 = vmatprep.mubr.bf16.mxu0 0
      %980 = vmatmul.mubr.bf16.gmra.mrb[0].mxu0 %v904
      %v981 = vpop.f32.mrb[0].mxu0
      %v982 = vadd.f32 0.0, %v981
      %v983 = vpop.f32.mrb[0].mxu0
      %v984 = vpop.f32.mrb[0].mxu0
      %v985 = vadd.f32 0.0, %v984
      %v986 = vpop.f32.mrb[0].mxu0
      %987 = vmatprep.mubr.bf16.mxu0 0
      %988 = vmatmul.mubr.bf16.gmra.mrb[0].mxu0 %v907
      %v989 = vpop.f32.mrb[0].mxu0
      %v990 = vadd.f32 0.0, %v989
      %v991 = vpop.f32.mrb[0].mxu0
      %v992 = vpop.f32.mrb[0].mxu0
      %v993 = vadd.f32 0.0, %v992
      %v994 = vpop.f32.mrb[0].mxu0
      %995 = vmatprep.mubr.bf16.mxu0 0
      %996 = vmatmul.mubr.bf16.gmra.mrb[0].mxu0 %v910
      %v997 = vpop.f32.mrb[0].mxu0
      %v998 = vadd.f32 0.0, %v997
      %v999 = vpop.f32.mrb[0].mxu0
      %v1000 = vpop.f32.mrb[0].mxu0
      %v1001 = vadd.f32 0.0, %v1000
      %v1002 = vpop.f32.mrb[0].mxu0
      %1003 = vmatprep.mubr.bf16.mxu0 0
      %1004 = vmatmul.mubr.bf16.gmra.mrb[0].mxu0 %v913
      %v1005 = vpop.f32.mrb[0].mxu0
      %v1006 = vadd.f32 0.0, %v1005
      %v1007 = vpop.f32.mrb[0].mxu0
      %v1008 = vpop.f32.mrb[0].mxu0
      %v1009 = vadd.f32 0.0, %v1008
      %v1010 = vpop.f32.mrb[0].mxu0
      %1011 = vdwg.mxu0
      %v1012 = vmul.f32 %v950, 0.17677669
      %v1013 = vmul.f32 %v953, 0.17677669
      %v1014 = vmul.f32 %v958, 0.17677669
      %v1015 = vmul.f32 %v961, 0.17677669
      %v1016 = vmul.f32 %v966, 0.17677669
      %v1017 = vmul.f32 %v969, 0.17677669
      %v1018 = vmul.f32 %v974, 0.17677669
      %v1019 = vmul.f32 %v977, 0.17677669
      %v1020 = vmul.f32 %v982, 0.17677669
      %v1021 = vmul.f32 %v985, 0.17677669
      %v1022 = vmul.f32 %v990, 0.17677669
      %v1023 = vmul.f32 %v993, 0.17677669
      %v1024 = vmul.f32 %v998, 0.17677669
      %v1025 = vmul.f32 %v1001, 0.17677669
      %v1026 = vmul.f32 %v1006, 0.17677669
      %v1027 = vmul.f32 %v1009, 0.17677669
      %v1028 = vxor.u32 %v1012, 2147483648
      %v1029 = vxor.u32 %v1013, 2147483648
      %v1030 = vxor.u32 %v1014, 2147483648
      %v1031 = vxor.u32 %v1015, 2147483648
      %v1032 = vxor.u32 %v1016, 2147483648
      %v1033 = vxor.u32 %v1017, 2147483648
      %v1034 = vxor.u32 %v1018, 2147483648
      %v1035 = vxor.u32 %v1019, 2147483648
      %v1036 = vxor.u32 %v1020, 2147483648
      %v1037 = vxor.u32 %v1021, 2147483648
      %v1038 = vxor.u32 %v1022, 2147483648
      %v1039 = vxor.u32 %v1023, 2147483648
      %v1040 = vxor.u32 %v1024, 2147483648
      %v1041 = vxor.u32 %v1025, 2147483648
      %v1042 = vxor.u32 %v1026, 2147483648
      %v1043 = vxor.u32 %v1027, 2147483648
      %v1044 = vmul.f32 %v1028, 1.442695
      %v1045 = vpow.pop %v1044
      %v1046 = vmul.f32 %v1029, 1.442695
      %v1047 = vpow.pop %v1046
      %v1048 = vmul.f32 %v1030, 1.442695
      %v1049 = vpow.pop %v1048
      %v1050 = vmul.f32 %v1031, 1.442695
      %v1051 = vpow.pop %v1050
      %v1052 = vmul.f32 %v1032, 1.442695
      %v1053 = vpow.pop %v1052
      %v1054 = vmul.f32 %v1033, 1.442695
      %v1055 = vpow.pop %v1054
      %v1056 = vmul.f32 %v1034, 1.442695
      %v1057 = vpow.pop %v1056
      %v1058 = vmul.f32 %v1035, 1.442695
      %v1059 = vpow.pop %v1058
      %v1060 = vmul.f32 %v1036, 1.442695
      %v1061 = vpow.pop %v1060
      %v1062 = vmul.f32 %v1037, 1.442695
      %v1063 = vpow.pop %v1062
      %v1064 = vmul.f32 %v1038, 1.442695
      %v1065 = vpow.pop %v1064
      %v1066 = vmul.f32 %v1039, 1.442695
      %v1067 = vpow.pop %v1066
      %v1068 = vmul.f32 %v1040, 1.442695
      %v1069 = vpow.pop %v1068
      %v1070 = vmul.f32 %v1041, 1.442695
      %v1071 = vpow.pop %v1070
      %v1072 = vmul.f32 %v1042, 1.442695
      %v1073 = vpow.pop %v1072
      %v1074 = vmul.f32 %v1043, 1.442695
      %v1075 = vpow.pop %v1074
      %v1076 = vadd.f32 %v1045, 1.0
      %v1077 = vadd.f32 %v1047, 1.0
      %v1078 = vadd.f32 %v1049, 1.0
      %v1079 = vadd.f32 %v1051, 1.0
      %v1080 = vadd.f32 %v1053, 1.0
      %v1081 = vadd.f32 %v1055, 1.0
      %v1082 = vadd.f32 %v1057, 1.0
      %v1083 = vadd.f32 %v1059, 1.0
      %v1084 = vadd.f32 %v1061, 1.0
      %v1085 = vadd.f32 %v1063, 1.0
      %v1086 = vadd.f32 %v1065, 1.0
      %v1087 = vadd.f32 %v1067, 1.0
      %v1088 = vadd.f32 %v1069, 1.0
      %v1089 = vadd.f32 %v1071, 1.0
      %v1090 = vadd.f32 %v1073, 1.0
      %v1091 = vadd.f32 %v1075, 1.0
      %v1092 = vrcp.pop %v1076
      %v1093 = vmul.f32 1.0, %v1092
      %v1094 = vrcp.pop %v1077
      %v1095 = vmul.f32 1.0, %v1094
      %v1096 = vrcp.pop %v1078
      %v1097 = vmul.f32 1.0, %v1096
      %v1098 = vrcp.pop %v1079
      %v1099 = vmul.f32 1.0, %v1098
      %v1100 = vrcp.pop %v1080
      %v1101 = vmul.f32 1.0, %v1100
      %v1102 = vrcp.pop %v1081
      %v1103 = vmul.f32 1.0, %v1102
      %v1104 = vrcp.pop %v1082
      %v1105 = vmul.f32 1.0, %v1104
      %v1106 = vrcp.pop %v1083
      %v1107 = vmul.f32 1.0, %v1106
      %v1108 = vrcp.pop %v1084
      %v1109 = vmul.f32 1.0, %v1108
      %v1110 = vrcp.pop %v1085
      %v1111 = vmul.f32 1.0, %v1110
      %v1112 = vrcp.pop %v1086
      %v1113 = vmul.f32 1.0, %v1112
      %v1114 = vrcp.pop %v1087
      %v1115 = vmul.f32 1.0, %v1114
      %v1116 = vrcp.pop %v1088
      %v1117 = vmul.f32 1.0, %v1116
      %v1118 = vrcp.pop %v1089
      %v1119 = vmul.f32 1.0, %v1118
      %v1120 = vrcp.pop %v1090
      %v1121 = vmul.f32 1.0, %v1120
      %v1122 = vrcp.pop %v1091
      %v1123 = vmul.f32 1.0, %v1122
      %v1124 = vmul.f32 %v424, %v1093
      %v1125 = vmul.f32 %v425, %v1095
      %v1126 = vmul.f32 %v426, %v1097
      %v1127 = vmul.f32 %v427, %v1099
      %v1128 = vmul.f32 %v428, %v1101
      %v1129 = vmul.f32 %v429, %v1103
      %v1130 = vmul.f32 %v430, %v1105
      %v1131 = vmul.f32 %v431, %v1107
      %v1132 = vmul.f32 %v432, %v1109
      %v1133 = vmul.f32 %v433, %v1111
      %v1134 = vmul.f32 %v434, %v1113
      %v1135 = vmul.f32 %v435, %v1115
      %v1136 = vmul.f32 %v436, %v1117
      %v1137 = vmul.f32 %v437, %v1119
      %v1138 = vmul.f32 %v438, %v1121
      %v1139 = vmul.f32 %v439, %v1123
      %v1140 = vsel %vm463, %v544, 1.0
      %v1141 = vsel %vm463, %v545, 1.0
      %v1142 = vsel %vm463, %v546, 1.0
      %v1143 = vsel %vm463, %v547, 1.0
      %v1144 = vsel %vm463, %v548, 1.0
      %v1145 = vsel %vm463, %v549, 1.0
      %v1146 = vsel %vm463, %v550, 1.0
      %v1147 = vsel %vm463, %v551, 1.0
      %v1148 = vsel %vm463, %v552, 1.0
      %v1149 = vsel %vm463, %v553, 1.0
      %v1150 = vsel %vm463, %v554, 1.0
      %v1151 = vsel %vm463, %v555, 1.0
      %v1152 = vsel %vm463, %v556, 1.0
      %v1153 = vsel %vm463, %v557, 1.0
      %v1154 = vsel %vm463, %v558, 1.0
      %v1155 = vsel %vm463, %v559, 1.0
      %v1156 = vpack.c.bf16 %v1125, %v1124
      %v1157 = vpack.c.bf16 %v1127, %v1126
      %v1158 = vpack.c.bf16 %v1129, %v1128
      %v1159 = vpack.c.bf16 %v1131, %v1130
      %v1160 = vpack.c.bf16 %v1133, %v1132
      %v1161 = vpack.c.bf16 %v1135, %v1134
      %v1162 = vpack.c.bf16 %v1137, %v1136
      %v1163 = vpack.c.bf16 %v1139, %v1138
      %v1164 = vpack.c.bf16 %v1141, %v1140
      %v1165 = vpack.c.bf16 %v1143, %v1142
      %v1166 = vpack.c.bf16 %v1145, %v1144
      %v1167 = vpack.c.bf16 %v1147, %v1146
      %v1168 = vpack.c.bf16 %v1149, %v1148
      %v1169 = vpack.c.bf16 %v1151, %v1150
      %v1170 = vpack.c.bf16 %v1153, %v1152
      %v1171 = vpack.c.bf16 %v1155, %v1154
      %1172 = vmatprep.subr.bf16.mxu0 0
      %1173 = vmatpush1.bf16.msra.mxu0 %v1164
      %1174 = vmatprep.subr.bf16.mxu0 0
      %1175 = vmatpush1.bf16.msra.mxu0 %v1165
      %1176 = vmatprep.subr.bf16.mxu0 0
      %1177 = vmatpush1.bf16.msra.mxu0 %v1166
      %1178 = vmatprep.subr.bf16.mxu0 0
      %1179 = vmatpush1.bf16.msra.mxu0 %v1167
      %1180 = vmatprep.subr.bf16.mxu0 0
      %1181 = vmatpush1.bf16.msra.mxu0 %v1168
      %1182 = vmatprep.subr.bf16.mxu0 0
      %1183 = vmatpush1.bf16.msra.mxu0 %v1169
      %1184 = vmatprep.subr.bf16.mxu0 0
      %1185 = vmatpush1.bf16.msra.mxu0 %v1170
      %1186 = vmatprep.subr.bf16.mxu0 0
      %1187 = vmatpush1.bf16.msra.mxu0 %v1171
      %1188 = vmatprep.subr.bf16.mxu0 0
      %1189 = vmatpush1.bf16.msra.mxu0 0
      %1190 = vmatprep.subr.bf16.mxu0 0
      %1191 = vmatpush1.bf16.msra.mxu0 0
      %1192 = vmatprep.subr.bf16.mxu0 0
      %1193 = vmatpush1.bf16.msra.mxu0 0
      %1194 = vmatprep.subr.bf16.mxu0 0
      %1195 = vmatpush1.bf16.msra.mxu0 0
      %1196 = vmatprep.subr.bf16.mxu0 0
      %1197 = vmatpush1.bf16.msra.mxu0 0
      %1198 = vmatprep.subr.bf16.mxu0 0
      %1199 = vmatpush1.bf16.msra.mxu0 0
      %1200 = vmatprep.subr.bf16.mxu0 0
      %1201 = vmatpush1.bf16.msra.mxu0 0
      %1202 = vmatprep.subr.bf16.mxu0 0
      %1203 = vmatpush1.bf16.msra.mxu0 0
      %1204 = vmatprep.mubr.bf16.mxu0 0
      %1205 = vmatmul.mubr.bf16.gmra.mrb[0].mxu0 %v1156
      %v1206 = vpop.f32.mrb[0].mxu0
      %v1207 = vadd.f32 0.0, %v1206
      %v1208 = vpop.f32.mrb[0].mxu0
      %v1209 = vpop.f32.mrb[0].mxu0
      %v1210 = vadd.f32 0.0, %v1209
      %v1211 = vpop.f32.mrb[0].mxu0
      %1212 = vmatprep.mubr.bf16.mxu0 0
      %1213 = vmatmul.mubr.bf16.gmra.mrb[0].mxu0 %v1157
      %v1214 = vpop.f32.mrb[0].mxu0
      %v1215 = vadd.f32 0.0, %v1214
      %v1216 = vpop.f32.mrb[0].mxu0
      %v1217 = vpop.f32.mrb[0].mxu0
      %v1218 = vadd.f32 0.0, %v1217
      %v1219 = vpop.f32.mrb[0].mxu0
      %1220 = vmatprep.mubr.bf16.mxu0 0
      %1221 = vmatmul.mubr.bf16.gmra.mrb[0].mxu0 %v1158
      %v1222 = vpop.f32.mrb[0].mxu0
      %v1223 = vadd.f32 0.0, %v1222
      %v1224 = vpop.f32.mrb[0].mxu0
      %v1225 = vpop.f32.mrb[0].mxu0
      %v1226 = vadd.f32 0.0, %v1225
      %v1227 = vpop.f32.mrb[0].mxu0
      %1228 = vmatprep.mubr.bf16.mxu0 0
      %1229 = vmatmul.mubr.bf16.gmra.mrb[0].mxu0 %v1159
      %v1230 = vpop.f32.mrb[0].mxu0
      %v1231 = vadd.f32 0.0, %v1230
      %v1232 = vpop.f32.mrb[0].mxu0
      %v1233 = vpop.f32.mrb[0].mxu0
      %v1234 = vadd.f32 0.0, %v1233
      %v1235 = vpop.f32.mrb[0].mxu0
      %1236 = vmatprep.mubr.bf16.mxu0 0
      %1237 = vmatmul.mubr.bf16.gmra.mrb[0].mxu0 %v1160
      %v1238 = vpop.f32.mrb[0].mxu0
      %v1239 = vadd.f32 0.0, %v1238
      %v1240 = vpop.f32.mrb[0].mxu0
      %v1241 = vpop.f32.mrb[0].mxu0
      %v1242 = vadd.f32 0.0, %v1241
      %v1243 = vpop.f32.mrb[0].mxu0
      %1244 = vmatprep.mubr.bf16.mxu0 0
      %1245 = vmatmul.mubr.bf16.gmra.mrb[0].mxu0 %v1161
      %v1246 = vpop.f32.mrb[0].mxu0
      %v1247 = vadd.f32 0.0, %v1246
      %v1248 = vpop.f32.mrb[0].mxu0
      %v1249 = vpop.f32.mrb[0].mxu0
      %v1250 = vadd.f32 0.0, %v1249
      %v1251 = vpop.f32.mrb[0].mxu0
      %1252 = vmatprep.mubr.bf16.mxu0 0
      %1253 = vmatmul.mubr.bf16.gmra.mrb[0].mxu0 %v1162
      %v1254 = vpop.f32.mrb[0].mxu0
      %v1255 = vadd.f32 0.0, %v1254
      %v1256 = vpop.f32.mrb[0].mxu0
      %v1257 = vpop.f32.mrb[0].mxu0
      %v1258 = vadd.f32 0.0, %v1257
      %v1259 = vpop.f32.mrb[0].mxu0
      %1260 = vmatprep.mubr.bf16.mxu0 0
      %1261 = vmatmul.mubr.bf16.gmra.mrb[0].mxu0 %v1163
      %v1262 = vpop.f32.mrb[0].mxu0
      %v1263 = vadd.f32 0.0, %v1262
      %v1264 = vpop.f32.mrb[0].mxu0
      %v1265 = vpop.f32.mrb[0].mxu0
      %v1266 = vadd.f32 0.0, %v1265
      %v1267 = vpop.f32.mrb[0].mxu0
      %1268 = vdwg.mxu0
      %v1269 = vadd.f32 %v1207, 1e-08
      %v1270 = vadd.f32 %v1210, 1e-08
      %v1271 = vadd.f32 %v1215, 1e-08
      %v1272 = vadd.f32 %v1218, 1e-08
      %v1273 = vadd.f32 %v1223, 1e-08
      %v1274 = vadd.f32 %v1226, 1e-08
      %v1275 = vadd.f32 %v1231, 1e-08
      %v1276 = vadd.f32 %v1234, 1e-08
      %v1277 = vadd.f32 %v1239, 1e-08
      %v1278 = vadd.f32 %v1242, 1e-08
      %v1279 = vadd.f32 %v1247, 1e-08
      %v1280 = vadd.f32 %v1250, 1e-08
      %v1281 = vadd.f32 %v1255, 1e-08
      %v1282 = vadd.f32 %v1258, 1e-08
      %v1283 = vadd.f32 %v1263, 1e-08
      %v1284 = vadd.f32 %v1266, 1e-08
      %v1285 = vrcp.pop %v1269
      %v1286 = vrcp.pop %v1270
      %v1287 = vrcp.pop %v1271
      %v1288 = vrcp.pop %v1272
      %v1289 = vrcp.pop %v1273
      %v1290 = vrcp.pop %v1274
      %v1291 = vrcp.pop %v1275
      %v1292 = vrcp.pop %v1276
      %v1293 = vrcp.pop %v1277
      %v1294 = vrcp.pop %v1278
      %v1295 = vrcp.pop %v1279
      %v1296 = vrcp.pop %v1280
      %v1297 = vrcp.pop %v1281
      %v1298 = vrcp.pop %v1282
      %v1299 = vrcp.pop %v1283
      %v1300 = vrcp.pop %v1284
      %1302 = vset.pattern.permute.xlu0 16
      %1303 = vperm.xlu0 %1302, %v1285
      %v1304 = vpop.permute.xlu0 %1303
      %1307 = vset.pattern.permute.xlu0 16
      %1308 = vperm.xlu0 %1307, %v1286
      %v1309 = vpop.permute.xlu0 %1308
      %1312 = vset.pattern.permute.xlu0 16
      %1313 = vperm.xlu0 %1312, %v1287
      %v1314 = vpop.permute.xlu0 %1313
      %1317 = vset.pattern.permute.xlu0 16
      %1318 = vperm.xlu0 %1317, %v1288
      %v1319 = vpop.permute.xlu0 %1318
      %1322 = vset.pattern.permute.xlu0 16
      %1323 = vperm.xlu0 %1322, %v1289
      %v1324 = vpop.permute.xlu0 %1323
      %1327 = vset.pattern.permute.xlu0 16
      %1328 = vperm.xlu0 %1327, %v1290
      %v1329 = vpop.permute.xlu0 %1328
      %1332 = vset.pattern.permute.xlu0 16
      %1333 = vperm.xlu0 %1332, %v1291
      %v1334 = vpop.permute.xlu0 %1333
      %1337 = vset.pattern.permute.xlu0 16
      %1338 = vperm.xlu0 %1337, %v1292
      %v1339 = vpop.permute.xlu0 %1338
      %1342 = vset.pattern.permute.xlu0 16
      %1343 = vperm.xlu0 %1342, %v1293
      %v1344 = vpop.permute.xlu0 %1343
      %1347 = vset.pattern.permute.xlu0 16
      %1348 = vperm.xlu0 %1347, %v1294
      %v1349 = vpop.permute.xlu0 %1348
      %1352 = vset.pattern.permute.xlu0 16
      %1353 = vperm.xlu0 %1352, %v1295
      %v1354 = vpop.permute.xlu0 %1353
      %1357 = vset.pattern.permute.xlu0 16
      %1358 = vperm.xlu0 %1357, %v1296
      %v1359 = vpop.permute.xlu0 %1358
      %1362 = vset.pattern.permute.xlu0 16
      %1363 = vperm.xlu0 %1362, %v1297
      %v1364 = vpop.permute.xlu0 %1363
      %1367 = vset.pattern.permute.xlu0 16
      %1368 = vperm.xlu0 %1367, %v1298
      %v1369 = vpop.permute.xlu0 %1368
      %1372 = vset.pattern.permute.xlu0 16
      %1373 = vperm.xlu0 %1372, %v1299
      %v1374 = vpop.permute.xlu0 %1373
      %1377 = vset.pattern.permute.xlu0 16
      %1378 = vperm.xlu0 %1377, %v1300
      %v1379 = vpop.permute.xlu0 %1378
      %v1381 = vmul.f32 %v1207, %v1304
      %v1382 = vmul.f32 %v1210, %v1309
      %v1383 = vmul.f32 %v1215, %v1314
      %v1384 = vmul.f32 %v1218, %v1319
      %v1385 = vmul.f32 %v1223, %v1324
      %v1386 = vmul.f32 %v1226, %v1329
      %v1387 = vmul.f32 %v1231, %v1334
      %v1388 = vmul.f32 %v1234, %v1339
      %v1389 = vmul.f32 %v1239, %v1344
      %v1390 = vmul.f32 %v1242, %v1349
      %v1391 = vmul.f32 %v1247, %v1354
      %v1392 = vmul.f32 %v1250, %v1359
      %v1393 = vmul.f32 %v1255, %v1364
      %v1394 = vmul.f32 %v1258, %v1369
      %v1395 = vmul.f32 %v1263, %v1374
      %v1396 = vmul.f32 %v1266, %v1379
      %v1397 = vld [vmem:[%s4] sm:$0xf]
      %v1398 = vld [vmem:[%s4 + $0x4] sm:$0xf]
      %v1399 = vpack.c.bf16 %v1382, %v1381
      %v1400 = vpack.c.bf16 %v1384, %v1383
      %v1401 = vpack.c.bf16 %v1386, %v1385
      %v1402 = vpack.c.bf16 %v1388, %v1387
      %v1403 = vpack.c.bf16 %v1390, %v1389
      %v1404 = vpack.c.bf16 %v1392, %v1391
      %v1405 = vpack.c.bf16 %v1394, %v1393
      %v1406 = vpack.c.bf16 %v1396, %v1395
      %v1407 = vlaneseq
      %v1408 = vshrl.u32 %v1407, 7
      %v1409 = vsub.s32 0, %v1408
      %v1410 = vrot.slane %v442, %v1409
      %v1413 = vunpack.c.l.b16 %v1397
      %v1414 = vunpack.c.l.b16 %v1398
      %v1415 = vpack.c.b16 %v1414, %v1413
      %v1418 = vsel %vm463, %v1399, 0
      %v1421 = vsel %vm463, %v1400, 0
      %v1424 = vsel %vm463, %v1401, 0
      %v1427 = vsel %vm463, %v1402, 0
      %v1430 = vsel %vm463, %v1403, 0
      %v1433 = vsel %vm463, %v1404, 0
      %v1436 = vsel %vm463, %v1405, 0
      %v1439 = vsel %vm463, %v1406, 0
      %1441 = vmatprep.subr.bf16.mxu0 0
      %1442 = vmatpush1.bf16.msra.mxu0 %v1415
      %1443 = vmatprep.subr.bf16.mxu0 0
      %1444 = vmatpush1.bf16.msra.mxu0 0
      %1445 = vmatprep.subr.bf16.mxu0 0
      %1446 = vmatpush1.bf16.msra.mxu0 0
      %1447 = vmatprep.subr.bf16.mxu0 0
      %1448 = vmatpush1.bf16.msra.mxu0 0
      %1449 = vmatprep.subr.bf16.mxu0 0
      %1450 = vmatpush1.bf16.msra.mxu0 0
      %1451 = vmatprep.subr.bf16.mxu0 0
      %1452 = vmatpush1.bf16.msra.mxu0 0
      %1453 = vmatprep.subr.bf16.mxu0 0
      %1454 = vmatpush1.bf16.msra.mxu0 0
      %1455 = vmatprep.subr.bf16.mxu0 0
      %1456 = vmatpush1.bf16.msra.mxu0 0
      %1457 = vmatprep.subr.bf16.mxu0 0
      %1458 = vmatpush1.bf16.msra.mxu0 0
      %1459 = vmatprep.subr.bf16.mxu0 0
      %1460 = vmatpush1.bf16.msra.mxu0 0
      %1461 = vmatprep.subr.bf16.mxu0 0
      %1462 = vmatpush1.bf16.msra.mxu0 0
      %1463 = vmatprep.subr.bf16.mxu0 0
      %1464 = vmatpush1.bf16.msra.mxu0 0
      %1465 = vmatprep.subr.bf16.mxu0 0
      %1466 = vmatpush1.bf16.msra.mxu0 0
      %1467 = vmatprep.subr.bf16.mxu0 0
      %1468 = vmatpush1.bf16.msra.mxu0 0
      %1469 = vmatprep.subr.bf16.mxu0 0
      %1470 = vmatpush1.bf16.msra.mxu0 0
      %1471 = vmatprep.subr.bf16.mxu0 0
      %1472 = vmatpush1.bf16.msra.mxu0 0
      %1473 = vmatprep.mubr.bf16.mxu0 0
      %1474 = vmatmul.mubr.bf16.gmra.mrb[0].mxu0 %v1418
      %v1475 = vpop.f32.mrb[0].mxu0
      %v1476 = vadd.f32 %v1410, %v1475
      %v1477 = vpop.f32.mrb[0].mxu0
      %v1478 = vpop.f32.mrb[0].mxu0
      %v1479 = vadd.f32 %v1410, %v1478
      %v1480 = vpop.f32.mrb[0].mxu0
      %1481 = vmatprep.mubr.bf16.mxu0 0
      %1482 = vmatmul.mubr.bf16.gmra.mrb[0].mxu0 %v1421
      %v1483 = vpop.f32.mrb[0].mxu0
      %v1484 = vadd.f32 %v1410, %v1483
      %v1485 = vpop.f32.mrb[0].mxu0
      %v1486 = vpop.f32.mrb[0].mxu0
      %v1487 = vadd.f32 %v1410, %v1486
      %v1488 = vpop.f32.mrb[0].mxu0
      %1489 = vmatprep.mubr.bf16.mxu0 0
      %1490 = vmatmul.mubr.bf16.gmra.mrb[0].mxu0 %v1424
      %v1491 = vpop.f32.mrb[0].mxu0
      %v1492 = vadd.f32 %v1410, %v1491
      %v1493 = vpop.f32.mrb[0].mxu0
      %v1494 = vpop.f32.mrb[0].mxu0
      %v1495 = vadd.f32 %v1410, %v1494
      %v1496 = vpop.f32.mrb[0].mxu0
      %1497 = vmatprep.mubr.bf16.mxu0 0
      %1498 = vmatmul.mubr.bf16.gmra.mrb[0].mxu0 %v1427
      %v1499 = vpop.f32.mrb[0].mxu0
      %v1500 = vadd.f32 %v1410, %v1499
      %v1501 = vpop.f32.mrb[0].mxu0
      %v1502 = vpop.f32.mrb[0].mxu0
      %v1503 = vadd.f32 %v1410, %v1502
      %v1504 = vpop.f32.mrb[0].mxu0
      %1505 = vmatprep.mubr.bf16.mxu0 0
      %1506 = vmatmul.mubr.bf16.gmra.mrb[0].mxu0 %v1430
      %v1507 = vpop.f32.mrb[0].mxu0
      %v1508 = vadd.f32 %v1410, %v1507
      %v1509 = vpop.f32.mrb[0].mxu0
      %v1510 = vpop.f32.mrb[0].mxu0
      %v1511 = vadd.f32 %v1410, %v1510
      %v1512 = vpop.f32.mrb[0].mxu0
      %1513 = vmatprep.mubr.bf16.mxu0 0
      %1514 = vmatmul.mubr.bf16.gmra.mrb[0].mxu0 %v1433
      %v1515 = vpop.f32.mrb[0].mxu0
      %v1516 = vadd.f32 %v1410, %v1515
      %v1517 = vpop.f32.mrb[0].mxu0
      %v1518 = vpop.f32.mrb[0].mxu0
      %v1519 = vadd.f32 %v1410, %v1518
      %v1520 = vpop.f32.mrb[0].mxu0
      %1521 = vmatprep.mubr.bf16.mxu0 0
      %1522 = vmatmul.mubr.bf16.gmra.mrb[0].mxu0 %v1436
      %v1523 = vpop.f32.mrb[0].mxu0
      %v1524 = vadd.f32 %v1410, %v1523
      %v1525 = vpop.f32.mrb[0].mxu0
      %v1526 = vpop.f32.mrb[0].mxu0
      %v1527 = vadd.f32 %v1410, %v1526
      %v1528 = vpop.f32.mrb[0].mxu0
      %1529 = vmatprep.mubr.bf16.mxu0 0
      %1530 = vmatmul.mubr.bf16.gmra.mrb[0].mxu0 %v1439
      %v1531 = vpop.f32.mrb[0].mxu0
      %v1532 = vadd.f32 %v1410, %v1531
      %v1533 = vpop.f32.mrb[0].mxu0
      %v1534 = vpop.f32.mrb[0].mxu0
      %v1535 = vadd.f32 %v1410, %v1534
      %v1536 = vpop.f32.mrb[0].mxu0
      %1537 = vdwg.mxu0
      %v1538 = vmax.f32 %v1476, 0.0
      %v1539 = vmax.f32 %v1479, 0.0
      %v1540 = vmax.f32 %v1484, 0.0
      %v1541 = vmax.f32 %v1487, 0.0
      %v1542 = vmax.f32 %v1492, 0.0
      %v1543 = vmax.f32 %v1495, 0.0
      %v1544 = vmax.f32 %v1500, 0.0
      %v1545 = vmax.f32 %v1503, 0.0
      %v1546 = vmax.f32 %v1508, 0.0
      %v1547 = vmax.f32 %v1511, 0.0
      %v1548 = vmax.f32 %v1516, 0.0
      %v1549 = vmax.f32 %v1519, 0.0
      %v1550 = vmax.f32 %v1524, 0.0
      %v1551 = vmax.f32 %v1527, 0.0
      %v1552 = vmax.f32 %v1532, 0.0
      %v1553 = vmax.f32 %v1535, 0.0
      %vm1554 = vcmask 138368
      %v1555 = vsel %vm1554, %v1207, -inf
      %v1556 = vrot.slane %v1555, 4
      %v1557 = vmax.f32 %v1555, %v1556
      %v1558 = vrot.slane %v1557, 2
      %v1559 = vmax.f32 %v1557, %v1558
      %v1560 = vrot.slane %v1559, 1
      %v1561 = vmax.f32 %v1559, %v1560
      %v1562 = vsel %vm1554, %v1210, -inf
      %v1563 = vrot.slane %v1562, 4
      %v1564 = vmax.f32 %v1562, %v1563
      %v1565 = vrot.slane %v1564, 2
      %v1566 = vmax.f32 %v1564, %v1565
      %v1567 = vrot.slane %v1566, 1
      %v1568 = vmax.f32 %v1566, %v1567
      %v1569 = vsel %vm1554, %v1215, -inf
      %v1570 = vrot.slane %v1569, 4
      %v1571 = vmax.f32 %v1569, %v1570
      %v1572 = vrot.slane %v1571, 2
      %v1573 = vmax.f32 %v1571, %v1572
      %v1574 = vrot.slane %v1573, 1
      %v1575 = vmax.f32 %v1573, %v1574
      %v1576 = vsel %vm1554, %v1218, -inf
      %v1577 = vrot.slane %v1576, 4
      %v1578 = vmax.f32 %v1576, %v1577
      %v1579 = vrot.slane %v1578, 2
      %v1580 = vmax.f32 %v1578, %v1579
      %v1581 = vrot.slane %v1580, 1
      %v1582 = vmax.f32 %v1580, %v1581
      %v1583 = vsel %vm1554, %v1223, -inf
      %v1584 = vrot.slane %v1583, 4
      %v1585 = vmax.f32 %v1583, %v1584
      %v1586 = vrot.slane %v1585, 2
      %v1587 = vmax.f32 %v1585, %v1586
      %v1588 = vrot.slane %v1587, 1
      %v1589 = vmax.f32 %v1587, %v1588
      %v1590 = vsel %vm1554, %v1226, -inf
      %v1591 = vrot.slane %v1590, 4
      %v1592 = vmax.f32 %v1590, %v1591
      %v1593 = vrot.slane %v1592, 2
      %v1594 = vmax.f32 %v1592, %v1593
      %v1595 = vrot.slane %v1594, 1
      %v1596 = vmax.f32 %v1594, %v1595
      %v1597 = vsel %vm1554, %v1231, -inf
      %v1598 = vrot.slane %v1597, 4
      %v1599 = vmax.f32 %v1597, %v1598
      %v1600 = vrot.slane %v1599, 2
      %v1601 = vmax.f32 %v1599, %v1600
      %v1602 = vrot.slane %v1601, 1
      %v1603 = vmax.f32 %v1601, %v1602
      %v1604 = vsel %vm1554, %v1234, -inf
      %v1605 = vrot.slane %v1604, 4
      %v1606 = vmax.f32 %v1604, %v1605
      %v1607 = vrot.slane %v1606, 2
      %v1608 = vmax.f32 %v1606, %v1607
      %v1609 = vrot.slane %v1608, 1
      %v1610 = vmax.f32 %v1608, %v1609
      %v1611 = vsel %vm1554, %v1239, -inf
      %v1612 = vrot.slane %v1611, 4
      %v1613 = vmax.f32 %v1611, %v1612
      %v1614 = vrot.slane %v1613, 2
      %v1615 = vmax.f32 %v1613, %v1614
      %v1616 = vrot.slane %v1615, 1
      %v1617 = vmax.f32 %v1615, %v1616
      %v1618 = vsel %vm1554, %v1242, -inf
      %v1619 = vrot.slane %v1618, 4
      %v1620 = vmax.f32 %v1618, %v1619
      %v1621 = vrot.slane %v1620, 2
      %v1622 = vmax.f32 %v1620, %v1621
      %v1623 = vrot.slane %v1622, 1
      %v1624 = vmax.f32 %v1622, %v1623
      %v1625 = vsel %vm1554, %v1247, -inf
      %v1626 = vrot.slane %v1625, 4
      %v1627 = vmax.f32 %v1625, %v1626
      %v1628 = vrot.slane %v1627, 2
      %v1629 = vmax.f32 %v1627, %v1628
      %v1630 = vrot.slane %v1629, 1
      %v1631 = vmax.f32 %v1629, %v1630
      %v1632 = vsel %vm1554, %v1250, -inf
      %v1633 = vrot.slane %v1632, 4
      %v1634 = vmax.f32 %v1632, %v1633
      %v1635 = vrot.slane %v1634, 2
      %v1636 = vmax.f32 %v1634, %v1635
      %v1637 = vrot.slane %v1636, 1
      %v1638 = vmax.f32 %v1636, %v1637
      %v1639 = vsel %vm1554, %v1255, -inf
      %v1640 = vrot.slane %v1639, 4
      %v1641 = vmax.f32 %v1639, %v1640
      %v1642 = vrot.slane %v1641, 2
      %v1643 = vmax.f32 %v1641, %v1642
      %v1644 = vrot.slane %v1643, 1
      %v1645 = vmax.f32 %v1643, %v1644
      %v1646 = vsel %vm1554, %v1258, -inf
      %v1647 = vrot.slane %v1646, 4
      %v1648 = vmax.f32 %v1646, %v1647
      %v1649 = vrot.slane %v1648, 2
      %v1650 = vmax.f32 %v1648, %v1649
      %v1651 = vrot.slane %v1650, 1
      %v1652 = vmax.f32 %v1650, %v1651
      %v1653 = vsel %vm1554, %v1263, -inf
      %v1654 = vrot.slane %v1653, 4
      %v1655 = vmax.f32 %v1653, %v1654
      %v1656 = vrot.slane %v1655, 2
      %v1657 = vmax.f32 %v1655, %v1656
      %v1658 = vrot.slane %v1657, 1
      %v1659 = vmax.f32 %v1657, %v1658
      %v1660 = vsel %vm1554, %v1266, -inf
      %v1661 = vrot.slane %v1660, 4
      %v1662 = vmax.f32 %v1660, %v1661
      %v1663 = vrot.slane %v1662, 2
      %v1664 = vmax.f32 %v1662, %v1663
      %v1665 = vrot.slane %v1664, 1
      %v1666 = vmax.f32 %v1664, %v1665
      %v1667 = vsub.f32 %v1207, %v1561
      %v1668 = vsub.f32 %v1210, %v1568
      %v1669 = vsub.f32 %v1215, %v1575
      %v1670 = vsub.f32 %v1218, %v1582
      %v1671 = vsub.f32 %v1223, %v1589
      %v1672 = vsub.f32 %v1226, %v1596
      %v1673 = vsub.f32 %v1231, %v1603
      %v1674 = vsub.f32 %v1234, %v1610
      %v1675 = vsub.f32 %v1239, %v1617
      %v1676 = vsub.f32 %v1242, %v1624
      %v1677 = vsub.f32 %v1247, %v1631
      %v1678 = vsub.f32 %v1250, %v1638
      %v1679 = vsub.f32 %v1255, %v1645
      %v1680 = vsub.f32 %v1258, %v1652
      %v1681 = vsub.f32 %v1263, %v1659
      %v1682 = vsub.f32 %v1266, %v1666
      %v1683 = vmul.f32 %v1667, 1.442695
      %v1684 = vpow.pop %v1683
      %v1685 = vmul.f32 %v1668, 1.442695
      %v1686 = vpow.pop %v1685
      %v1687 = vmul.f32 %v1669, 1.442695
      %v1688 = vpow.pop %v1687
      %v1689 = vmul.f32 %v1670, 1.442695
      %v1690 = vpow.pop %v1689
      %v1691 = vmul.f32 %v1671, 1.442695
      %v1692 = vpow.pop %v1691
      %v1693 = vmul.f32 %v1672, 1.442695
      %v1694 = vpow.pop %v1693
      %v1695 = vmul.f32 %v1673, 1.442695
      %v1696 = vpow.pop %v1695
      %v1697 = vmul.f32 %v1674, 1.442695
      %v1698 = vpow.pop %v1697
      %v1699 = vmul.f32 %v1675, 1.442695
      %v1700 = vpow.pop %v1699
      %v1701 = vmul.f32 %v1676, 1.442695
      %v1702 = vpow.pop %v1701
      %v1703 = vmul.f32 %v1677, 1.442695
      %v1704 = vpow.pop %v1703
      %v1705 = vmul.f32 %v1678, 1.442695
      %v1706 = vpow.pop %v1705
      %v1707 = vmul.f32 %v1679, 1.442695
      %v1708 = vpow.pop %v1707
      %v1709 = vmul.f32 %v1680, 1.442695
      %v1710 = vpow.pop %v1709
      %v1711 = vmul.f32 %v1681, 1.442695
      %v1712 = vpow.pop %v1711
      %v1713 = vmul.f32 %v1682, 1.442695
      %v1714 = vpow.pop %v1713
      %v1715 = vsel %vm1554, %v1684, 0.0
      %v1716 = vrot.slane %v1715, 4
      %v1717 = vadd.f32 %v1715, %v1716
      %v1718 = vrot.slane %v1717, 2
      %v1719 = vadd.f32 %v1717, %v1718
      %v1720 = vrot.slane %v1719, 1
      %v1721 = vadd.f32 %v1719, %v1720
      %v1722 = vsel %vm1554, %v1686, 0.0
      %v1723 = vrot.slane %v1722, 4
      %v1724 = vadd.f32 %v1722, %v1723
      %v1725 = vrot.slane %v1724, 2
      %v1726 = vadd.f32 %v1724, %v1725
      %v1727 = vrot.slane %v1726, 1
      %v1728 = vadd.f32 %v1726, %v1727
      %v1729 = vsel %vm1554, %v1688, 0.0
      %v1730 = vrot.slane %v1729, 4
      %v1731 = vadd.f32 %v1729, %v1730
      %v1732 = vrot.slane %v1731, 2
      %v1733 = vadd.f32 %v1731, %v1732
      %v1734 = vrot.slane %v1733, 1
      %v1735 = vadd.f32 %v1733, %v1734
      %v1736 = vsel %vm1554, %v1690, 0.0
      %v1737 = vrot.slane %v1736, 4
      %v1738 = vadd.f32 %v1736, %v1737
      %v1739 = vrot.slane %v1738, 2
      %v1740 = vadd.f32 %v1738, %v1739
      %v1741 = vrot.slane %v1740, 1
      %v1742 = vadd.f32 %v1740, %v1741
      %v1743 = vsel %vm1554, %v1692, 0.0
      %v1744 = vrot.slane %v1743, 4
      %v1745 = vadd.f32 %v1743, %v1744
      %v1746 = vrot.slane %v1745, 2
      %v1747 = vadd.f32 %v1745, %v1746
      %v1748 = vrot.slane %v1747, 1
      %v1749 = vadd.f32 %v1747, %v1748
      %v1750 = vsel %vm1554, %v1694, 0.0
      %v1751 = vrot.slane %v1750, 4
      %v1752 = vadd.f32 %v1750, %v1751
      %v1753 = vrot.slane %v1752, 2
      %v1754 = vadd.f32 %v1752, %v1753
      %v1755 = vrot.slane %v1754, 1
      %v1756 = vadd.f32 %v1754, %v1755
      %v1757 = vsel %vm1554, %v1696, 0.0
      %v1758 = vrot.slane %v1757, 4
      %v1759 = vadd.f32 %v1757, %v1758
      %v1760 = vrot.slane %v1759, 2
      %v1761 = vadd.f32 %v1759, %v1760
      %v1762 = vrot.slane %v1761, 1
      %v1763 = vadd.f32 %v1761, %v1762
      %v1764 = vsel %vm1554, %v1698, 0.0
      %v1765 = vrot.slane %v1764, 4
      %v1766 = vadd.f32 %v1764, %v1765
      %v1767 = vrot.slane %v1766, 2
      %v1768 = vadd.f32 %v1766, %v1767
      %v1769 = vrot.slane %v1768, 1
      %v1770 = vadd.f32 %v1768, %v1769
      %v1771 = vsel %vm1554, %v1700, 0.0
      %v1772 = vrot.slane %v1771, 4
      %v1773 = vadd.f32 %v1771, %v1772
      %v1774 = vrot.slane %v1773, 2
      %v1775 = vadd.f32 %v1773, %v1774
      %v1776 = vrot.slane %v1775, 1
      %v1777 = vadd.f32 %v1775, %v1776
      %v1778 = vsel %vm1554, %v1702, 0.0
      %v1779 = vrot.slane %v1778, 4
      %v1780 = vadd.f32 %v1778, %v1779
      %v1781 = vrot.slane %v1780, 2
      %v1782 = vadd.f32 %v1780, %v1781
      %v1783 = vrot.slane %v1782, 1
      %v1784 = vadd.f32 %v1782, %v1783
      %v1785 = vsel %vm1554, %v1704, 0.0
      %v1786 = vrot.slane %v1785, 4
      %v1787 = vadd.f32 %v1785, %v1786
      %v1788 = vrot.slane %v1787, 2
      %v1789 = vadd.f32 %v1787, %v1788
      %v1790 = vrot.slane %v1789, 1
      %v1791 = vadd.f32 %v1789, %v1790
      %v1792 = vsel %vm1554, %v1706, 0.0
      %v1793 = vrot.slane %v1792, 4
      %v1794 = vadd.f32 %v1792, %v1793
      %v1795 = vrot.slane %v1794, 2
      %v1796 = vadd.f32 %v1794, %v1795
      %v1797 = vrot.slane %v1796, 1
      %v1798 = vadd.f32 %v1796, %v1797
      %v1799 = vsel %vm1554, %v1708, 0.0
      %v1800 = vrot.slane %v1799, 4
      %v1801 = vadd.f32 %v1799, %v1800
      %v1802 = vrot.slane %v1801, 2
      %v1803 = vadd.f32 %v1801, %v1802
      %v1804 = vrot.slane %v1803, 1
      %v1805 = vadd.f32 %v1803, %v1804
      %v1806 = vsel %vm1554, %v1710, 0.0
      %v1807 = vrot.slane %v1806, 4
      %v1808 = vadd.f32 %v1806, %v1807
      %v1809 = vrot.slane %v1808, 2
      %v1810 = vadd.f32 %v1808, %v1809
      %v1811 = vrot.slane %v1810, 1
      %v1812 = vadd.f32 %v1810, %v1811
      %v1813 = vsel %vm1554, %v1712, 0.0
      %v1814 = vrot.slane %v1813, 4
      %v1815 = vadd.f32 %v1813, %v1814
      %v1816 = vrot.slane %v1815, 2
      %v1817 = vadd.f32 %v1815, %v1816
      %v1818 = vrot.slane %v1817, 1
      %v1819 = vadd.f32 %v1817, %v1818
      %v1820 = vsel %vm1554, %v1714, 0.0
      %v1821 = vrot.slane %v1820, 4
      %v1822 = vadd.f32 %v1820, %v1821
      %v1823 = vrot.slane %v1822, 2
      %v1824 = vadd.f32 %v1822, %v1823
      %v1825 = vrot.slane %v1824, 1
      %v1826 = vadd.f32 %v1824, %v1825
      %v1827 = vadd.f32 %v1721, 1e-08
      %v1828 = vadd.f32 %v1728, 1e-08
      %v1829 = vadd.f32 %v1735, 1e-08
      %v1830 = vadd.f32 %v1742, 1e-08
      %v1831 = vadd.f32 %v1749, 1e-08
      %v1832 = vadd.f32 %v1756, 1e-08
      %v1833 = vadd.f32 %v1763, 1e-08
      %v1834 = vadd.f32 %v1770, 1e-08
      %v1835 = vadd.f32 %v1777, 1e-08
      %v1836 = vadd.f32 %v1784, 1e-08
      %v1837 = vadd.f32 %v1791, 1e-08
      %v1838 = vadd.f32 %v1798, 1e-08
      %v1839 = vadd.f32 %v1805, 1e-08
      %v1840 = vadd.f32 %v1812, 1e-08
      %v1841 = vadd.f32 %v1819, 1e-08
      %v1842 = vadd.f32 %v1826, 1e-08
      %v1843 = vrcp.pop %v1827
      %v1844 = vrcp.pop %v1828
      %v1845 = vrcp.pop %v1829
      %v1846 = vrcp.pop %v1830
      %v1847 = vrcp.pop %v1831
      %v1848 = vrcp.pop %v1832
      %v1849 = vrcp.pop %v1833
      %v1850 = vrcp.pop %v1834
      %v1851 = vrcp.pop %v1835
      %v1852 = vrcp.pop %v1836
      %v1853 = vrcp.pop %v1837
      %v1854 = vrcp.pop %v1838
      %v1855 = vrcp.pop %v1839
      %v1856 = vrcp.pop %v1840
      %v1857 = vrcp.pop %v1841
      %v1858 = vrcp.pop %v1842
      %v1859 = vmul.f32 %v1684, %v1843
      %v1860 = vmul.f32 %v1686, %v1844
      %v1861 = vmul.f32 %v1688, %v1845
      %v1862 = vmul.f32 %v1690, %v1846
      %v1863 = vmul.f32 %v1692, %v1847
      %v1864 = vmul.f32 %v1694, %v1848
      %v1865 = vmul.f32 %v1696, %v1849
      %v1866 = vmul.f32 %v1698, %v1850
      %v1867 = vmul.f32 %v1700, %v1851
      %v1868 = vmul.f32 %v1702, %v1852
      %v1869 = vmul.f32 %v1704, %v1853
      %v1870 = vmul.f32 %v1706, %v1854
      %v1871 = vmul.f32 %v1708, %v1855
      %v1872 = vmul.f32 %v1710, %v1856
      %v1873 = vmul.f32 %v1712, %v1857
      %v1874 = vmul.f32 %v1714, %v1858
      %1876 = vset.pattern.permute.xlu0 16
      %1877 = vperm.xlu0 %1876, %v1859
      %v1878 = vpop.permute.xlu0 %1877
      %1881 = vset.pattern.permute.xlu0 16
      %1882 = vperm.xlu0 %1881, %v1860
      %v1883 = vpop.permute.xlu0 %1882
      %1886 = vset.pattern.permute.xlu0 16
      %1887 = vperm.xlu0 %1886, %v1861
      %v1888 = vpop.permute.xlu0 %1887
      %1891 = vset.pattern.permute.xlu0 16
      %1892 = vperm.xlu0 %1891, %v1862
      %v1893 = vpop.permute.xlu0 %1892
      %1896 = vset.pattern.permute.xlu0 16
      %1897 = vperm.xlu0 %1896, %v1863
      %v1898 = vpop.permute.xlu0 %1897
      %1901 = vset.pattern.permute.xlu0 16
      %1902 = vperm.xlu0 %1901, %v1864
      %v1903 = vpop.permute.xlu0 %1902
      %1906 = vset.pattern.permute.xlu0 16
      %1907 = vperm.xlu0 %1906, %v1865
      %v1908 = vpop.permute.xlu0 %1907
      %1911 = vset.pattern.permute.xlu0 16
      %1912 = vperm.xlu0 %1911, %v1866
      %v1913 = vpop.permute.xlu0 %1912
      %1916 = vset.pattern.permute.xlu0 16
      %1917 = vperm.xlu0 %1916, %v1867
      %v1918 = vpop.permute.xlu0 %1917
      %1921 = vset.pattern.permute.xlu0 16
      %1922 = vperm.xlu0 %1921, %v1868
      %v1923 = vpop.permute.xlu0 %1922
      %1926 = vset.pattern.permute.xlu0 16
      %1927 = vperm.xlu0 %1926, %v1869
      %v1928 = vpop.permute.xlu0 %1927
      %1931 = vset.pattern.permute.xlu0 16
      %1932 = vperm.xlu0 %1931, %v1870
      %v1933 = vpop.permute.xlu0 %1932
      %1936 = vset.pattern.permute.xlu0 16
      %1937 = vperm.xlu0 %1936, %v1871
      %v1938 = vpop.permute.xlu0 %1937
      %1941 = vset.pattern.permute.xlu0 16
      %1942 = vperm.xlu0 %1941, %v1872
      %v1943 = vpop.permute.xlu0 %1942
      %1946 = vset.pattern.permute.xlu0 16
      %1947 = vperm.xlu0 %1946, %v1873
      %v1948 = vpop.permute.xlu0 %1947
      %1951 = vset.pattern.permute.xlu0 16
      %1952 = vperm.xlu0 %1951, %v1874
      %v1953 = vpop.permute.xlu0 %1952
      %v1955 = vmul.f32 %v1878, %v1538
      %v1956 = vmul.f32 %v1883, %v1539
      %v1957 = vmul.f32 %v1888, %v1540
      %v1958 = vmul.f32 %v1893, %v1541
      %v1959 = vmul.f32 %v1898, %v1542
      %v1960 = vmul.f32 %v1903, %v1543
      %v1961 = vmul.f32 %v1908, %v1544
      %v1962 = vmul.f32 %v1913, %v1545
      %v1963 = vmul.f32 %v1918, %v1546
      %v1964 = vmul.f32 %v1923, %v1547
      %v1965 = vmul.f32 %v1928, %v1548
      %v1966 = vmul.f32 %v1933, %v1549
      %v1967 = vmul.f32 %v1938, %v1550
      %v1968 = vmul.f32 %v1943, %v1551
      %v1969 = vmul.f32 %v1948, %v1552
      %v1970 = vmul.f32 %v1953, %v1553
      %v1971 = vsel %vm745, %v1955, 0.0
      %v1972 = vrot.slane %v1971, 4
      %v1973 = vadd.f32 %v1971, %v1972
      %v1974 = vrot.slane %v1973, 2
      %v1975 = vadd.f32 %v1973, %v1974
      %v1976 = vrot.slane %v1975, 1
      %v1977 = vadd.f32 %v1975, %v1976
      %v1978 = vsel %vm745, %v1956, 0.0
      %v1979 = vrot.slane %v1978, 4
      %v1980 = vadd.f32 %v1978, %v1979
      %v1981 = vrot.slane %v1980, 2
      %v1982 = vadd.f32 %v1980, %v1981
      %v1983 = vrot.slane %v1982, 1
      %v1984 = vadd.f32 %v1982, %v1983
      %v1985 = vsel %vm745, %v1957, 0.0
      %v1986 = vrot.slane %v1985, 4
      %v1987 = vadd.f32 %v1985, %v1986
      %v1988 = vrot.slane %v1987, 2
      %v1989 = vadd.f32 %v1987, %v1988
      %v1990 = vrot.slane %v1989, 1
      %v1991 = vadd.f32 %v1989, %v1990
      %v1992 = vsel %vm745, %v1958, 0.0
      %v1993 = vrot.slane %v1992, 4
      %v1994 = vadd.f32 %v1992, %v1993
      %v1995 = vrot.slane %v1994, 2
      %v1996 = vadd.f32 %v1994, %v1995
      %v1997 = vrot.slane %v1996, 1
      %v1998 = vadd.f32 %v1996, %v1997
      %v1999 = vsel %vm745, %v1959, 0.0
      %v2000 = vrot.slane %v1999, 4
      %v2001 = vadd.f32 %v1999, %v2000
      %v2002 = vrot.slane %v2001, 2
      %v2003 = vadd.f32 %v2001, %v2002
      %v2004 = vrot.slane %v2003, 1
      %v2005 = vadd.f32 %v2003, %v2004
      %v2006 = vsel %vm745, %v1960, 0.0
      %v2007 = vrot.slane %v2006, 4
      %v2008 = vadd.f32 %v2006, %v2007
      %v2009 = vrot.slane %v2008, 2
      %v2010 = vadd.f32 %v2008, %v2009
      %v2011 = vrot.slane %v2010, 1
      %v2012 = vadd.f32 %v2010, %v2011
      %v2013 = vsel %vm745, %v1961, 0.0
      %v2014 = vrot.slane %v2013, 4
      %v2015 = vadd.f32 %v2013, %v2014
      %v2016 = vrot.slane %v2015, 2
      %v2017 = vadd.f32 %v2015, %v2016
      %v2018 = vrot.slane %v2017, 1
      %v2019 = vadd.f32 %v2017, %v2018
      %v2020 = vsel %vm745, %v1962, 0.0
      %v2021 = vrot.slane %v2020, 4
      %v2022 = vadd.f32 %v2020, %v2021
      %v2023 = vrot.slane %v2022, 2
      %v2024 = vadd.f32 %v2022, %v2023
      %v2025 = vrot.slane %v2024, 1
      %v2026 = vadd.f32 %v2024, %v2025
      %v2027 = vsel %vm745, %v1963, 0.0
      %v2028 = vrot.slane %v2027, 4
      %v2029 = vadd.f32 %v2027, %v2028
      %v2030 = vrot.slane %v2029, 2
      %v2031 = vadd.f32 %v2029, %v2030
      %v2032 = vrot.slane %v2031, 1
      %v2033 = vadd.f32 %v2031, %v2032
      %v2034 = vsel %vm745, %v1964, 0.0
      %v2035 = vrot.slane %v2034, 4
      %v2036 = vadd.f32 %v2034, %v2035
      %v2037 = vrot.slane %v2036, 2
      %v2038 = vadd.f32 %v2036, %v2037
      %v2039 = vrot.slane %v2038, 1
      %v2040 = vadd.f32 %v2038, %v2039
      %v2041 = vsel %vm745, %v1965, 0.0
      %v2042 = vrot.slane %v2041, 4
      %v2043 = vadd.f32 %v2041, %v2042
      %v2044 = vrot.slane %v2043, 2
      %v2045 = vadd.f32 %v2043, %v2044
      %v2046 = vrot.slane %v2045, 1
      %v2047 = vadd.f32 %v2045, %v2046
      %v2048 = vsel %vm745, %v1966, 0.0
      %v2049 = vrot.slane %v2048, 4
      %v2050 = vadd.f32 %v2048, %v2049
      %v2051 = vrot.slane %v2050, 2
      %v2052 = vadd.f32 %v2050, %v2051
      %v2053 = vrot.slane %v2052, 1
      %v2054 = vadd.f32 %v2052, %v2053
      %v2055 = vsel %vm745, %v1967, 0.0
      %v2056 = vrot.slane %v2055, 4
      %v2057 = vadd.f32 %v2055, %v2056
      %v2058 = vrot.slane %v2057, 2
      %v2059 = vadd.f32 %v2057, %v2058
      %v2060 = vrot.slane %v2059, 1
      %v2061 = vadd.f32 %v2059, %v2060
      %v2062 = vsel %vm745, %v1968, 0.0
      %v2063 = vrot.slane %v2062, 4
      %v2064 = vadd.f32 %v2062, %v2063
      %v2065 = vrot.slane %v2064, 2
      %v2066 = vadd.f32 %v2064, %v2065
      %v2067 = vrot.slane %v2066, 1
      %v2068 = vadd.f32 %v2066, %v2067
      %v2069 = vsel %vm745, %v1969, 0.0
      %v2070 = vrot.slane %v2069, 4
      %v2071 = vadd.f32 %v2069, %v2070
      %v2072 = vrot.slane %v2071, 2
      %v2073 = vadd.f32 %v2071, %v2072
      %v2074 = vrot.slane %v2073, 1
      %v2075 = vadd.f32 %v2073, %v2074
      %v2076 = vsel %vm745, %v1970, 0.0
      %v2077 = vrot.slane %v2076, 4
      %v2078 = vadd.f32 %v2076, %v2077
      %v2079 = vrot.slane %v2078, 2
      %v2080 = vadd.f32 %v2078, %v2079
      %v2081 = vrot.slane %v2080, 1
      %v2082 = vadd.f32 %v2080, %v2081
      %v2083 = vld [vmem:[%s5] sm:$0xf]
      %v2084 = vld [vmem:[%s5 + $0x4] sm:$0xf]
      %v2085 = vld [vmem:[%s5 + $0x8] sm:$0xf]
      %v2086 = vld [vmem:[%s5 + $0xc] sm:$0xf]
      %v2087 = vpack.c.bf16 %v1977, %v1977
      %v2088 = vpack.c.bf16 %v1984, %v1984
      %v2089 = vpack.c.bf16 %v1991, %v1991
      %v2090 = vpack.c.bf16 %v1998, %v1998
      %v2091 = vpack.c.bf16 %v2005, %v2005
      %v2092 = vpack.c.bf16 %v2012, %v2012
      %v2093 = vpack.c.bf16 %v2019, %v2019
      %v2094 = vpack.c.bf16 %v2026, %v2026
      %v2095 = vpack.c.bf16 %v2033, %v2033
      %v2096 = vpack.c.bf16 %v2040, %v2040
      %v2097 = vpack.c.bf16 %v2047, %v2047
      %v2098 = vpack.c.bf16 %v2054, %v2054
      %v2099 = vpack.c.bf16 %v2061, %v2061
      %v2100 = vpack.c.bf16 %v2068, %v2068
      %v2101 = vpack.c.bf16 %v2075, %v2075
      %v2102 = vpack.c.bf16 %v2082, %v2082
      %v2103 = vlaneseq
      %v2104 = vshrl.u32 %v2103, 7
      %v2105 = vsub.s32 0, %v2104
      %v2106 = vrot.slane %v443, %v2105
      %v2123 = vunpack.c.l.b16 %v2087
      %v2124 = vunpack.c.l.b16 %v2088
      %v2125 = vunpack.c.l.b16 %v2089
      %v2126 = vunpack.c.l.b16 %v2090
      %v2127 = vunpack.c.l.b16 %v2091
      %v2128 = vunpack.c.l.b16 %v2092
      %v2129 = vunpack.c.l.b16 %v2093
      %v2130 = vunpack.c.l.b16 %v2094
      %v2131 = vunpack.c.l.b16 %v2095
      %v2132 = vunpack.c.l.b16 %v2096
      %v2133 = vunpack.c.l.b16 %v2097
      %v2134 = vunpack.c.l.b16 %v2098
      %v2135 = vunpack.c.l.b16 %v2099
      %v2136 = vunpack.c.l.b16 %v2100
      %v2137 = vunpack.c.l.b16 %v2101
      %v2138 = vunpack.c.l.b16 %v2102
      %vm2139 = vcmask 1041409
      %v2140 = vsel %vm2139, %v2124, %v2123
      %vm2141 = vcmask 1042434
      %v2142 = vsel %vm2141, %v2125, %v2140
      %vm2143 = vcmask 1043459
      %v2144 = vsel %vm2143, %v2126, %v2142
      %vm2145 = vcmask 1044484
      %v2146 = vsel %vm2145, %v2127, %v2144
      %vm2147 = vcmask 1045509
      %v2148 = vsel %vm2147, %v2128, %v2146
      %vm2149 = vcmask 1046534
      %v2150 = vsel %vm2149, %v2129, %v2148
      %vm2151 = vcmask 1047559
      %v2152 = vsel %vm2151, %v2130, %v2150
      %v2153 = vsel %vm2139, %v2132, %v2131
      %v2154 = vsel %vm2141, %v2133, %v2153
      %v2155 = vsel %vm2143, %v2134, %v2154
      %v2156 = vsel %vm2145, %v2135, %v2155
      %v2157 = vsel %vm2147, %v2136, %v2156
      %v2158 = vsel %vm2149, %v2137, %v2157
      %v2159 = vsel %vm2151, %v2138, %v2158
      %v2160 = vpack.c.b16 %v2159, %v2152
      %v2165 = vunpack.c.l.b16 %v2083
      %v2166 = vunpack.c.l.b16 %v2084
      %v2167 = vunpack.c.l.b16 %v2085
      %v2168 = vunpack.c.l.b16 %v2086
      %v2169 = vpack.c.b16 %v2166, %v2165
      %v2170 = vpack.c.b16 %v2168, %v2167
      %v2174 = vsel %vm745, %v2160, 0
      %2176 = vmatprep.subr.bf16.mxu0 0
      %2177 = vmatpush1.bf16.msra.mxu0 %v2169
      %2178 = vmatprep.subr.bf16.mxu0 0
      %2179 = vmatpush1.bf16.msra.mxu0 %v2170
      %2180 = vmatprep.subr.bf16.mxu0 0
      %2181 = vmatpush1.bf16.msra.mxu0 0
      %2182 = vmatprep.subr.bf16.mxu0 0
      %2183 = vmatpush1.bf16.msra.mxu0 0
      %2184 = vmatprep.subr.bf16.mxu0 0
      %2185 = vmatpush1.bf16.msra.mxu0 0
      %2186 = vmatprep.subr.bf16.mxu0 0
      %2187 = vmatpush1.bf16.msra.mxu0 0
      %2188 = vmatprep.subr.bf16.mxu0 0
      %2189 = vmatpush1.bf16.msra.mxu0 0
      %2190 = vmatprep.subr.bf16.mxu0 0
      %2191 = vmatpush1.bf16.msra.mxu0 0
      %2192 = vmatprep.subr.bf16.mxu0 0
      %2193 = vmatpush1.bf16.msra.mxu0 0
      %2194 = vmatprep.subr.bf16.mxu0 0
      %2195 = vmatpush1.bf16.msra.mxu0 0
      %2196 = vmatprep.subr.bf16.mxu0 0
      %2197 = vmatpush1.bf16.msra.mxu0 0
      %2198 = vmatprep.subr.bf16.mxu0 0
      %2199 = vmatpush1.bf16.msra.mxu0 0
      %2200 = vmatprep.subr.bf16.mxu0 0
      %2201 = vmatpush1.bf16.msra.mxu0 0
      %2202 = vmatprep.subr.bf16.mxu0 0
      %2203 = vmatpush1.bf16.msra.mxu0 0
      %2204 = vmatprep.subr.bf16.mxu0 0
      %2205 = vmatpush1.bf16.msra.mxu0 0
      %2206 = vmatprep.subr.bf16.mxu0 0
      %2207 = vmatpush1.bf16.msra.mxu0 0
      %2208 = vmatprep.mubr.bf16.mxu0 0
      %2209 = vmatmul.mubr.bf16.gmra.mrb[0].mxu0 %v2174
      %v2210 = vpop.f32.mrb[0].mxu0
      %v2211 = vadd.f32 %v2106, %v2210
      %v2212 = vpop.f32.mrb[0].mxu0
      %v2213 = vpop.f32.mrb[0].mxu0
      %v2214 = vadd.f32 %v2106, %v2213
      %v2215 = vpop.f32.mrb[0].mxu0
      %2216 = vdwg.mxu0
      %v2217 = vmax.f32 %v2211, 0.0
      %v2218 = vmax.f32 %v2214, 0.0
      %v2219 = vsel %vm463, %v2217, 0.0
      %2220 = vadd.xlane.f32.xlu0 %v2219
      %v2221 = vpop.xlane.xlu0 %2220
      %v2222 = vsel %vm463, %v2218, 0.0
      %2223 = vadd.xlane.f32.xlu0 %v2222
      %v2224 = vpop.xlane.xlu0 %2223
      %v2225 = vrcp.pop 16.0
      %v2226 = vmul.f32 %v2221, %v2225
      %v2227 = vmul.f32 %v2224, %v2225
      %v2228 = vsub.f32 %v2217, %v2226
      %v2229 = vsub.f32 %v2218, %v2227
      %v2230 = vmul.f32 %v2228, %v2228
      %v2231 = vmul.f32 %v2229, %v2229
      %v2232 = vsel %vm463, %v2230, 0.0
      %2233 = vadd.xlane.f32.xlu0 %v2232
      %v2234 = vpop.xlane.xlu0 %2233
      %v2235 = vsel %vm463, %v2231, 0.0
      %2236 = vadd.xlane.f32.xlu0 %v2235
      %v2237 = vpop.xlane.xlu0 %2236
      %v2238 = vmul.f32 %v2234, %v2225
      %v2239 = vmul.f32 %v2237, %v2225
      %v2240 = vadd.f32 %v2238, 1e-05
      %v2241 = vadd.f32 %v2239, 1e-05
      %v2242 = vrsqrt.pop %v2240
      %v2243 = vrsqrt.pop %v2241
      %v2244 = vmul.f32 %v2228, %v2242
      %v2245 = vmul.f32 %v2229, %v2243
      %v2246 = vlaneseq
      %v2247 = vshrl.u32 %v2246, 7
      %v2248 = vsub.s32 0, %v2247
      %v2249 = vrot.slane %v444, %v2248
      %v2250 = vmul.f32 %v2244, %v2249
      %v2251 = vmul.f32 %v2245, %v2249
      %v2252 = vlaneseq
      %v2253 = vshrl.u32 %v2252, 7
      %v2254 = vsub.s32 0, %v2253
      %v2255 = vrot.slane %v445, %v2254
      %v2256 = vadd.f32 %v2250, %v2255
      %v2257 = vadd.f32 %v2251, %v2255
      %v2258 = vld [vmem:[%s6] sm:$0xf]
      %v2259 = vld [vmem:[%s6 + $0x4] sm:$0xf]
      %v2260 = vpack.c.bf16 %v2257, %v2256
      %v2261 = vlaneseq
      %v2262 = vshrl.u32 %v2261, 7
      %v2263 = vsub.s32 0, %v2262
      %v2264 = vrot.slane %v446, %v2263
      %v2267 = vunpack.c.l.b16 %v2258
      %v2268 = vunpack.c.l.b16 %v2259
      %v2269 = vpack.c.b16 %v2268, %v2267
      %v2272 = vsel %vm463, %v2260, 0
      %2274 = vmatprep.subr.bf16.mxu0 0
      %2275 = vmatpush1.bf16.msra.mxu0 %v2269
      %2276 = vmatprep.subr.bf16.mxu0 0
      %2277 = vmatpush1.bf16.msra.mxu0 0
      %2278 = vmatprep.subr.bf16.mxu0 0
      %2279 = vmatpush1.bf16.msra.mxu0 0
      %2280 = vmatprep.subr.bf16.mxu0 0
      %2281 = vmatpush1.bf16.msra.mxu0 0
      %2282 = vmatprep.subr.bf16.mxu0 0
      %2283 = vmatpush1.bf16.msra.mxu0 0
      %2284 = vmatprep.subr.bf16.mxu0 0
      %2285 = vmatpush1.bf16.msra.mxu0 0
      %2286 = vmatprep.subr.bf16.mxu0 0
      %2287 = vmatpush1.bf16.msra.mxu0 0
      %2288 = vmatprep.subr.bf16.mxu0 0
      %2289 = vmatpush1.bf16.msra.mxu0 0
      %2290 = vmatprep.subr.bf16.mxu0 0
      %2291 = vmatpush1.bf16.msra.mxu0 0
      %2292 = vmatprep.subr.bf16.mxu0 0
      %2293 = vmatpush1.bf16.msra.mxu0 0
      %2294 = vmatprep.subr.bf16.mxu0 0
      %2295 = vmatpush1.bf16.msra.mxu0 0
      %2296 = vmatprep.subr.bf16.mxu0 0
      %2297 = vmatpush1.bf16.msra.mxu0 0
      %2298 = vmatprep.subr.bf16.mxu0 0
      %2299 = vmatpush1.bf16.msra.mxu0 0
      %2300 = vmatprep.subr.bf16.mxu0 0
      %2301 = vmatpush1.bf16.msra.mxu0 0
      %2302 = vmatprep.subr.bf16.mxu0 0
      %2303 = vmatpush1.bf16.msra.mxu0 0
      %2304 = vmatprep.subr.bf16.mxu0 0
      %2305 = vmatpush1.bf16.msra.mxu0 0
      %2306 = vmatprep.mubr.bf16.mxu0 0
      %2307 = vmatmul.mubr.bf16.gmra.mrb[0].mxu0 %v2272
      %v2308 = vpop.f32.mrb[0].mxu0
      %v2309 = vadd.f32 %v2264, %v2308
      %v2310 = vpop.f32.mrb[0].mxu0
      %v2311 = vpop.f32.mrb[0].mxu0
      %v2312 = vadd.f32 %v2264, %v2311
      %v2313 = vpop.f32.mrb[0].mxu0
      %2314 = vdwg.mxu0
      %vm2315 = vcmask 31744
      %v2316 = vsel %vm2315, %v2309, 0.0
      %v2317 = vsel %vm2315, %v2312, 0.0
      %2318 = vst [vmem:[%s396] sm:$0xff] %v2316
      %2319 = vst [vmem:[%s396 + $0x8] sm:$0xff] %v2317
      %2320 = vst [vmem:[%s402] sm:$0xff] %v1124
      %2321 = vst [vmem:[%s402 + $0x8] sm:$0xff] %v1125
      %2322 = vst [vmem:[%s402 + $0x10] sm:$0xff] %v1126
      %2323 = vst [vmem:[%s402 + $0x18] sm:$0xff] %v1127
      %2324 = vst [vmem:[%s402 + $0x20] sm:$0xff] %v1128
      %2325 = vst [vmem:[%s402 + $0x28] sm:$0xff] %v1129
      %2326 = vst [vmem:[%s402 + $0x30] sm:$0xff] %v1130
      %2327 = vst [vmem:[%s402 + $0x38] sm:$0xff] %v1131
      %2328 = vst [vmem:[%s402 + $0x40] sm:$0xff] %v1132
      %2329 = vst [vmem:[%s402 + $0x48] sm:$0xff] %v1133
      %2330 = vst [vmem:[%s402 + $0x50] sm:$0xff] %v1134
      %2331 = vst [vmem:[%s402 + $0x58] sm:$0xff] %v1135
      %2332 = vst [vmem:[%s402 + $0x60] sm:$0xff] %v1136
      %2333 = vst [vmem:[%s402 + $0x68] sm:$0xff] %v1137
      %2334 = vst [vmem:[%s402 + $0x70] sm:$0xff] %v1138
      %2335 = vst [vmem:[%s402 + $0x78] sm:$0xff] %v1139
      %v2336 = vadd.f32 %v1124, %v1125
      %v2337 = vadd.f32 %v2336, %v1126
      %v2338 = vadd.f32 %v2337, %v1127
      %v2339 = vadd.f32 %v2338, %v1128
      %v2340 = vadd.f32 %v2339, %v1129
      %v2341 = vadd.f32 %v2340, %v1130
      %v2342 = vadd.f32 %v2341, %v1131
      %v2343 = vadd.f32 %v2342, %v1132
      %v2344 = vadd.f32 %v2343, %v1133
      %v2345 = vadd.f32 %v2344, %v1134
      %v2346 = vadd.f32 %v2345, %v1135
      %v2347 = vadd.f32 %v2346, %v1136
      %v2348 = vadd.f32 %v2347, %v1137
      %v2349 = vadd.f32 %v2348, %v1138
      %v2350 = vadd.f32 %v2349, %v1139
      %2351 = vadd.xlane.f32.xlu0 %v2350
      %v2352 = vpop.xlane.xlu0 %2351
      %v2353 = vrot.slane %v2352, 4
      %v2354 = vadd.f32 %v2352, %v2353
      %v2355 = vrot.slane %v2354, 2
      %v2356 = vadd.f32 %v2354, %v2355
      %v2357 = vrot.slane %v2356, 1
      %v2358 = vadd.f32 %v2356, %v2357
      %s2359 = vtos %v2358
      %v2360 = vstv %s2359
      %v2361 = vadd.f32 %v2360, 0.0
      %2362 = vst [vmem:[%s406] sm:$0x1] %v2361
      %s2363 = smul.u32 2, %s22
      %p2364 = scmp.lt.s32.totalorder %s2363, 3
      %s2365 = scalar_select %p2364, %s2363, 3
      %s2366 = smul.addr %s2365, 8
      %s2367 = scalar_lea.vmem %s8, %s2366
      %s2368 = smul.u32 16, %s22
      %p2369 = scmp.lt.s32.totalorder %s2368, 31
      %s2370 = scalar_select %p2369, %s2368, 31
      %s2371 = smul.addr %s2370, 8
      %s2372 = scalar_lea.vmem %s9, %s2371
      %p2373 = scmp.lt.s32.totalorder %s22, 1
      %s2374 = scalar_select %p2373, %s22, 1
      %s2375 = scalar_lea.vmem %s10, %s2374
      // Predicated region
      $region53: #{improved_edge_gnn_forward.1} parent=51 // pred_check
        %p2376 = pneg %p218
      $region54: #{improved_edge_gnn_forward.1} parent=51 // pred_check_branch
        %2378 = sbr.rel (%p2376) target = $region56
      $region55: #{improved_edge_gnn_forward.1} parent=51 // pred_region
        %s2379 = smul.u32 2, %s22
      $region56: #{improved_edge_gnn_forward.1} parent=51 // pred_fallthru
        _
      // Predicated region
      $region57: #{improved_edge_gnn_forward.1} parent=51 // pred_check
        %p2380 = pneg %p244
      $region58: #{improved_edge_gnn_forward.1} parent=51 // pred_check_branch
        %2382 = sbr.rel (%p2380) target = $region60
      $region59: #{improved_edge_gnn_forward.1} parent=51 // pred_region
        %s2383 = smul.u32 16, %s22
      $region60: #{improved_edge_gnn_forward.1} parent=51 // pred_fallthru
        _
      // Predicated region
      $region61: #{improved_edge_gnn_forward.1} parent=51 // pred_check
        %p2384 = pneg %p270
      $region62: #{improved_edge_gnn_forward.1} parent=51 // pred_check_branch
        %2386 = sbr.rel (%p2384) target = $region64
      $region63: #{improved_edge_gnn_forward.1} parent=51 // pred_region
        _
      $region64: #{improved_edge_gnn_forward.1} parent=51 // pred_fallthru
        _
    $region52: #{improved_edge_gnn_forward.1} parent=5 // pred_fallthru
      _
    %p2387 = scmp.le.s32.totalorder 2, %s17
    // Predicated region
    $region65: #{improved_edge_gnn_forward.1} parent=5 // pred_check
      %p2388 = pneg %p2387
    $region66: #{improved_edge_gnn_forward.1} parent=5 // pred_check_branch
      %2390 = sbr.rel (%p2388) target = $region68
    $region67: #{improved_edge_gnn_forward.1} parent=5 // pred_region
      %s2391 = ssub.s32 %s17, 2
      // Predicated region
      $region69: #{improved_edge_gnn_forward.1} parent=67 // pred_check
        %p2392 = pneg %p224
      $region70: #{improved_edge_gnn_forward.1} parent=67 // pred_check_branch
        %2394 = sbr.rel (%p2392) target = $region72
      $region71: #{improved_edge_gnn_forward.1} parent=67 // pred_region
        %s2395 = smul.u32 2, %s23
        %p2396 = scmp.lt.s32.totalorder %s2395, 3
        %s2397 = scalar_select %p2396, %s2395, 3
        %s2398 = smul.addr %s2397, 8
        %s2399 = scalar_lea.vmem %s8, %s2398
      $region72: #{improved_edge_gnn_forward.1} parent=67 // pred_fallthru
        _
      // Predicated region
      $region73: #{improved_edge_gnn_forward.1} parent=67 // pred_check
        %p2400 = pneg %p250
      $region74: #{improved_edge_gnn_forward.1} parent=67 // pred_check_branch
        %2402 = sbr.rel (%p2400) target = $region76
      $region75: #{improved_edge_gnn_forward.1} parent=67 // pred_region
        %s2403 = smul.u32 16, %s23
        %p2404 = scmp.lt.s32.totalorder %s2403, 31
        %s2405 = scalar_select %p2404, %s2403, 31
        %s2406 = smul.addr %s2405, 8
        %s2407 = scalar_lea.vmem %s9, %s2406
      $region76: #{improved_edge_gnn_forward.1} parent=67 // pred_fallthru
        _
      // Predicated region
      $region77: #{improved_edge_gnn_forward.1} parent=67 // pred_check
        %p2408 = pneg %p276
      $region78: #{improved_edge_gnn_forward.1} parent=67 // pred_check_branch
        %2410 = sbr.rel (%p2408) target = $region80
      $region79: #{improved_edge_gnn_forward.1} parent=67 // pred_region
        %p2411 = scmp.lt.s32.totalorder %s23, 1
        %s2412 = scalar_select %p2411, %s23, 1
        %s2413 = scalar_lea.vmem %s10, %s2412
      $region80: #{improved_edge_gnn_forward.1} parent=67 // pred_fallthru
        _
    $region68: #{improved_edge_gnn_forward.1} parent=5 // pred_fallthru
      _
  $region6: #{improved_edge_gnn_forward.1} parent=0 // loop_footer
    %s21 = sadd.s32 1, %s17
  $region7: #{improved_edge_gnn_forward.1} parent=0 // loop_footer_branch
    %16 = sbr.rel target = $region3
  $region8: #{improved_edge_gnn_forward.1} parent=0 // loop_exit
    _

</llo_original>
